<compile_context>
chip_gen: v5e
topology: v5e:2x2
jax: 0.10.0
libtpu: 0.0.40
codegen_flags: <defaults>
</compile_context>

<pallas_src>
import functools

import jax
import jax.numpy as jnp
from jax.experimental import pallas as pl
from jax.experimental.pallas import tpu as pltpu


def _round_up(x, m):
    return ((x + m - 1) // m) * m


def _fit_tile(target, dim):
    """Largest tile <= target that divides dim (targets: powers of two)."""
    t = min(target, dim)
    while dim % t:
        t //= 2
    return t


# ---------------------------------------------------------------------------
# Kernel: one bipartite half-layer, fused propagate + layer-sum.
#   prop          = sum_k A[i, k] @ E[k, :]      (f32 accumulate in acc_out)
#   e_out[i, :]   = prop (bf16)
#   acc_out[i, :] = acc_in[i, :] + prop (f32)    (acc_in aliased to acc_out)
# ---------------------------------------------------------------------------
def _propagate_acc_kernel(tk, e_resident, a_ref, e_ref, acc_in_ref,
                          e_out_ref, acc_out_ref):
    k = pl.program_id(1)

    @pl.when(k == 0)
    def _():
        acc_out_ref[...] = jnp.zeros_like(acc_out_ref)

    if e_resident:
        # E is fully VMEM-resident; take the K-slab with a dynamic slice.
        start = pl.multiple_of(k * tk, tk)
        e_blk = e_ref[pl.ds(start, tk), :]
    else:
        e_blk = e_ref[...]

    # f32 accumulation directly into the k-resident output block (no scratch).
    acc_out_ref[...] += jnp.dot(a_ref[...], e_blk,
                                preferred_element_type=jnp.float32)

    @pl.when(k == pl.num_programs(1) - 1)
    def _():
        e_out_ref[...] = acc_out_ref[...].astype(e_out_ref.dtype)
        acc_out_ref[...] += acc_in_ref[...]


def propagate_accumulate(a_bf16, e_bf16, acc_f32, *, tm=1024, tk=2048,
                         e_resident=None, a_buffers=None,
                         vmem_limit_bytes=48 * 1024 * 1024):
    """One bipartite half-layer: returns (A @ E as bf16, acc + A @ E as f32).

    a_bf16: (M, K) bf16   e_bf16: (K, D) bf16   acc_f32: (M, D) f32
    K-tiled: per-step VMEM ~ 2*tm*tk*2 (double-buffered bf16 A tile)
             + E (resident: ~K*D*2; else 2*tk*D*2) + tm*D*(4+2+4) -> indep. of N.

    Generation notes (perf review):
      v6e: tm=1024, tk=2048 (4 MiB A tile, ~3 us DMA/step)        [default]
      v7x: tm=1024, tk=4096..8192 (8-16 MiB A tile); keep total VMEM under
           ~48 MiB of the 64 MiB physical; consider a_buffers=3 and fp8 A.
      v5e: tm=512..1024, tk=1024..2048; the explicit vmem_limit_bytes already
           overrides the 16 MiB scoped default (do NOT shrink tm to 256).
      Resident E (cuts the D/tm re-fetch) is feasible up to N~150-300K rows on
      v5e/v6e (raise vmem_limit_bytes toward ~96 MiB of 128 MiB physical) and
      roughly half that on v7x (64 MiB physical).
    """
    M, K = a_bf16.shape
    K2, D = e_bf16.shape
    assert K == K2 and acc_f32.shape == (M, D)
    assert D % 128 == 0, "pad latent_dim to a multiple of 128 (lane-dense out)"

    tm = _fit_tile(tm, M)
    tk = _fit_tile(tk, K)
    assert tm % 16 == 0 and (tk % 128 == 0 or tk == K), \
        "pad user/item counts so power-of-two tiles divide them"

    if e_resident is None:
        per_step = 2 * tm * tk * 2 + 2 * tm * D * (4 + 2 + 4)
        e_resident = (2 * K * D * 2) <= max(0, (vmem_limit_bytes * 3) // 4
                                            - per_step)

    if e_resident:
        e_spec = pl.BlockSpec((K, D), lambda i, k: (0, 0))   # fetched once
    else:
        e_spec = pl.BlockSpec((tk, D), lambda i, k: (k, 0))  # K-slab stream

    if a_buffers is None:
        a_spec = pl.BlockSpec((tm, tk), lambda i, k: (i, k))
    else:
        # Deeper A pipelining (e.g. 3 on v7x) if i-block transitions expose DMA.
        a_spec = pl.BlockSpec((tm, tk), lambda i, k: (i, k),
                              pipeline_mode=pl.Buffered(a_buffers))

    kernel = functools.partial(_propagate_acc_kernel, tk, e_resident)

    return pl.pallas_call(
        kernel,
        out_shape=(jax.ShapeDtypeStruct((M, D), jnp.bfloat16),
                   jax.ShapeDtypeStruct((M, D), jnp.float32)),
        grid_spec=pltpu.PrefetchScalarGridSpec(
            num_scalar_prefetch=0,
            grid=(M // tm, K // tk),
            in_specs=[
                a_spec,                                       # A tile (bf16)
                e_spec,                                       # E (bf16)
                pl.BlockSpec((tm, D), lambda i, k: (i, 0)),   # acc_in (f32)
            ],
            out_specs=[
                pl.BlockSpec((tm, D), lambda i, k: (i, 0)),   # A @ E  (bf16)
                pl.BlockSpec((tm, D), lambda i, k: (i, 0)),   # acc + A @ E (f32)
            ],
        ),
        # acc_in (input 2) aliases acc_out (output 1): in-place layer-sum.
        input_output_aliases={2: 1},
        compiler_params=pltpu.CompilerParams(
            dimension_semantics=("parallel", "arbitrary"),
            vmem_limit_bytes=vmem_limit_bytes),
    )(a_bf16, e_bf16, acc_f32)


# ---------------------------------------------------------------------------
# Graph preparation (done ONCE, outside jit/forward): normalized bipartite
# blocks in bf16, zero-padded so power-of-two tiles divide the dimensions.
# ---------------------------------------------------------------------------
def build_bipartite_graph_blocks(R, *, align=256, dtype=jnp.bfloat16):
    """A_ui = D_u^{-1/2} R D_i^{-1/2} and A_iu = A_ui^T (padded, bf16)."""
    U, I = R.shape
    deg_u = R.sum(axis=1)
    deg_i = R.sum(axis=0)
    du = jnp.where(deg_u > 0, 1.0 / jnp.sqrt(deg_u), 0.0)
    di = jnp.where(deg_i > 0, 1.0 / jnp.sqrt(deg_i), 0.0)
    a_ui = R * du[:, None] * di[None, :]
    U_pad, I_pad = _round_up(U, align), _round_up(I, align)
    a_ui_p = jnp.zeros((U_pad, I_pad), jnp.float32).at[:U, :I].set(a_ui)
    return a_ui_p.astype(dtype), a_ui_p.T.astype(dtype)


# ---------------------------------------------------------------------------
# LightGCN "computer" + forward (glue in plain JAX, hot path in Pallas)
# ---------------------------------------------------------------------------
def lightgcn_forward(a_ui, a_iu, user_emb, item_emb, users, items, *,
                     n_layers, tm=1024, tk=2048, e_resident=None):
    U, d0 = user_emb.shape
    I = item_emb.shape[0]
    U_pad, I_pad = a_ui.shape
    assert a_iu.shape == (I_pad, U_pad)
    D = _round_up(d0, 128)                       # lane-dense output columns

    e_u0 = jnp.zeros((U_pad, D), jnp.float32).at[:U, :d0].set(user_emb)
    e_i0 = jnp.zeros((I_pad, D), jnp.float32).at[:I, :d0].set(item_emb)

    e_u = e_u0.astype(jnp.bfloat16)
    e_i = e_i0.astype(jnp.bfloat16)
    acc_u = e_u0                                  # embs[0]; running layer sum
    acc_i = e_i0
    for _ in range(n_layers):
        # Both halves read the PREVIOUS layer's embeddings (block off-diagonal
        # structure of the full adjacency => simultaneous update).
        e_u_new, acc_u = propagate_accumulate(a_ui, e_i, acc_u, tm=tm, tk=tk,
                                              e_resident=e_resident)
        e_i_new, acc_i = propagate_accumulate(a_iu, e_u, acc_i, tm=tm, tk=tk,
                                              e_resident=e_resident)
        e_u, e_i = e_u_new, e_i_new

    scale = 1.0 / jnp.float32(n_layers + 1)       # mean over stacked layers
    # Gather + B-wide dot products left to XLA: at small batch a pallas_call is
    # overhead-bound and its (B, 1) output would force masked stores.
    users_emb = acc_u[users] * scale
    items_emb = acc_i[items] * scale
    return jnp.sum(users_emb * items_emb, axis=-1)                 # gamma


if __name__ == "__main__":
    num_users, num_items = 256, 256
    latent_dim = 64                        # padded to 128 inside the forward
    n_layers = 3
    batch = 16

    key = jax.random.PRNGKey(0)
    k_u, k_i, k_g, k_bu, k_bi = jax.random.split(key, 5)

    # nn.init.normal_(weight, std=0.1)
    user_emb = 0.1 * jax.random.normal(k_u, (num_users, latent_dim), jnp.float32)
    item_emb = 0.1 * jax.random.normal(k_i, (num_items, latent_dim), jnp.float32)
    R = (jax.random.uniform(k_g, (num_users, num_items)) < 0.1).astype(jnp.float32)

    # Built once, outside the forward (bf16 blocks of the normalized graph).
    a_ui, a_iu = build_bipartite_graph_blocks(R, align=256)

    users = jax.random.randint(k_bu, (batch,), 0, num_users, dtype=jnp.int32)
    items = jax.random.randint(k_bi, (batch,), 0, num_items, dtype=jnp.int32)

    fwd = jax.jit(lightgcn_forward,
                  static_argnames=("n_layers", "tm", "tk", "e_resident"))
    # tm=tk=128 at this toy size so the K-tiled accumulator path is exercised
    # (grid = (2, 2) per half-layer); at real N use the larger defaults.
    gamma = fwd(a_ui, a_iu, user_emb, item_emb, users, items,
                n_layers=n_layers, tm=128, tk=128)
    gamma = jax.block_until_ready(gamma)
    assert gamma.shape == (batch,)

    # Same math with the E stream re-fetched per i-block (non-resident path).
    gamma_stream = fwd(a_ui, a_iu, user_emb, item_emb, users, items,
                       n_layers=n_layers, tm=128, tk=128, e_resident=False)
    gamma_stream = jax.block_until_ready(gamma_stream)
    assert jnp.allclose(gamma, gamma_stream, atol=1e-5, rtol=1e-5)

    # --- matched-precision reference (bf16 A/E, f32 accumulation) ---
    D = 128
    eu0 = jnp.zeros((a_ui.shape[0], D), jnp.float32).at[:num_users, :latent_dim].set(user_emb)
    ei0 = jnp.zeros((a_iu.shape[0], D), jnp.float32).at[:num_items, :latent_dim].set(item_emb)
    eu_b, ei_b = eu0.astype(jnp.bfloat16), ei0.astype(jnp.bfloat16)
    accu, acci = eu0, ei0
    for _ in range(n_layers):
        pu = jnp.dot(a_ui, ei_b, preferred_element_type=jnp.float32)
        pi = jnp.dot(a_iu, eu_b, preferred_element_type=jnp.float32)
        accu, acci = accu + pu, acci + pi
        eu_b, ei_b = pu.astype(jnp.bfloat16), pi.astype(jnp.bfloat16)
    lu = accu / (n_layers + 1)
    li = acci / (n_layers + 1)
    ref_match = jnp.sum(lu[users] * li[items], axis=-1)
    assert jnp.allclose(gamma, ref_match, atol=5e-4, rtol=5e-3)

    # --- loose check against the pure-f32 torch semantics (dense N x N A) ---
    N = num_users + num_items
    A = jnp.zeros((N, N), jnp.float32)
    A = A.at[:num_users, num_users:].set(R)
    A = A.at[num_users:, :num_users].set(R.T)
    deg = A.sum(axis=1)
    dinv = jnp.where(deg > 0, 1.0 / jnp.sqrt(deg), 0.0)
    G = A * dinv[:, None] * dinv[None, :]
    e32 = jnp.concatenate([user_emb, item_emb], axis=0)
    acc32 = e32
    for _ in range(n_layers):
        e32 = G @ e32
        acc32 = acc32 + e32
    light32 = acc32 / (n_layers + 1)
    ref32 = jnp.sum(light32[users] * light32[num_users + items], axis=-1)
    assert jnp.allclose(gamma, ref32, atol=1e-2, rtol=5e-2)

    print("KERNEL_OK")
</pallas_src>

<mosaic_0001>
module attributes {stable_mosaic.version = 11 : i64} {
  func.func @_propagate_acc_kernel(%arg0: i32, %arg1: i32, %arg2: memref<128x128xbf16, #tpu.memory_space<vmem>>, %arg3: memref<256x128xbf16, #tpu.memory_space<vmem>>, %arg4: memref<128x128xf32, #tpu.memory_space<vmem>>, %arg5: memref<128x128xbf16, #tpu.memory_space<vmem>>, %arg6: memref<128x128xf32, #tpu.memory_space<vmem>>) attributes {dimension_semantics = [#tpu.dimension_semantics<parallel>, #tpu.dimension_semantics<arbitrary>], iteration_bounds = array<i64: 2, 2>, scalar_prefetch = 0 : i64, scratch_operands = 0 : i64, tpu.core_type = #tpu.core_type<tc>, window_params = [{transform_indices = @transform_0, window_bounds = array<i64: 128, 128>}, {pipeline_mode = #tpu.pipeline_mode<synchronous>, transform_indices = @transform_1, window_bounds = array<i64: 256, 128>}, {transform_indices = @transform_2, window_bounds = array<i64: 128, 128>}, {transform_indices = @transform_3, window_bounds = array<i64: 128, 128>}, {transform_indices = @transform_4, window_bounds = array<i64: 128, 128>}]} {
    %c0_i32 = arith.constant 0 : i32
    %0 = arith.cmpi eq, %arg1, %c0_i32 : i32
    %1 = arith.extui %0 : i1 to i32
    %c0_i32_0 = arith.constant 0 : i32
    %2 = arith.cmpi ne, %1, %c0_i32_0 : i32
    scf.if %2 {
      %cst_8 = arith.constant 0.000000e+00 : f32
      %15 = vector.broadcast %cst_8 : f32 to vector<128x128xf32>
      %c0_9 = arith.constant 0 : index
      %c0_10 = arith.constant 0 : index
      %16 = vector.load %arg6[%c0_9, %c0_10] : memref<128x128xf32, #tpu.memory_space<vmem>>, vector<128x128xf32>
      tpu.vector_store %arg6[%c0_9, %c0_10], %15 {strides = array<i32>} : memref<128x128xf32, #tpu.memory_space<vmem>>, vector<128x128xf32>,
    } else {
    }
    %c128_i32 = arith.constant 128 : i32
    %3 = arith.muli %arg1, %c128_i32 : i32
    %4 = tpu.assume_multiple %3, 128 : i32
    %5 = arith.index_cast %4 : i32 to index
    %c0 = arith.constant 0 : index
    %6 = vector.load %arg3[%5, %c0] : memref<256x128xbf16, #tpu.memory_space<vmem>>, vector<128x128xbf16>
    %c0_1 = arith.constant 0 : index
    %c0_2 = arith.constant 0 : index
    %7 = vector.load %arg6[%c0_1, %c0_2] : memref<128x128xf32, #tpu.memory_space<vmem>>, vector<128x128xf32>
    %c0_3 = arith.constant 0 : index
    %c0_4 = arith.constant 0 : index
    %8 = vector.load %arg2[%c0_3, %c0_4] : memref<128x128xbf16, #tpu.memory_space<vmem>>, vector<128x128xbf16>
    %cst = arith.constant dense<0.000000e+00> : vector<128x128xf32>
    %9 = tpu.matmul %8, %6, %cst {dimension_numbers = #tpu.dot_dimension_numbers<[1], [0], [0], [1], [0, 0, 1, 1], [], []>} : vector<128x128xbf16>, vector<128x128xbf16>, vector<128x128xf32> -> vector<128x128xf32>
    %10 = arith.addf %7, %9 : vector<128x128xf32>
    %c0_5 = arith.constant 0 : index
    %c0_6 = arith.constant 0 : index
    %11 = vector.load %arg6[%c0_5, %c0_6] : memref<128x128xf32, #tpu.memory_space<vmem>>, vector<128x128xf32>
    tpu.vector_store %arg6[%c0_5, %c0_6], %10 {strides = array<i32>} : memref<128x128xf32, #tpu.memory_space<vmem>>, vector<128x128xf32>,
    %c1_i32 = arith.constant 1 : i32
    %12 = arith.cmpi eq, %arg1, %c1_i32 : i32
    %13 = arith.extui %12 : i1 to i32
    %c0_i32_7 = arith.constant 0 : i32
    %14 = arith.cmpi ne, %13, %c0_i32_7 : i32
    scf.if %14 {
      %c0_8 = arith.constant 0 : index
      %c0_9 = arith.constant 0 : index
      %15 = vector.load %arg6[%c0_8, %c0_9] : memref<128x128xf32, #tpu.memory_space<vmem>>, vector<128x128xf32>
      %16 = arith.truncf %15 : vector<128x128xf32> to vector<128x128xbf16>
      %c0_10 = arith.constant 0 : index
      %c0_11 = arith.constant 0 : index
      %17 = vector.load %arg5[%c0_10, %c0_11] : memref<128x128xbf16, #tpu.memory_space<vmem>>, vector<128x128xbf16>
      tpu.vector_store %arg5[%c0_10, %c0_11], %16 {strides = array<i32>} : memref<128x128xbf16, #tpu.memory_space<vmem>>, vector<128x128xbf16>,
      %c0_12 = arith.constant 0 : index
      %c0_13 = arith.constant 0 : index
      %18 = vector.load %arg6[%c0_12, %c0_13] : memref<128x128xf32, #tpu.memory_space<vmem>>, vector<128x128xf32>
      %c0_14 = arith.constant 0 : index
      %c0_15 = arith.constant 0 : index
      %19 = vector.load %arg4[%c0_14, %c0_15] : memref<128x128xf32, #tpu.memory_space<vmem>>, vector<128x128xf32>
      %20 = arith.addf %18, %19 : vector<128x128xf32>
      %c0_16 = arith.constant 0 : index
      %c0_17 = arith.constant 0 : index
      %21 = vector.load %arg6[%c0_16, %c0_17] : memref<128x128xf32, #tpu.memory_space<vmem>>, vector<128x128xf32>
      tpu.vector_store %arg6[%c0_16, %c0_17], %20 {strides = array<i32>} : memref<128x128xf32, #tpu.memory_space<vmem>>, vector<128x128xf32>,
    } else {
    }
    return
  }
  func.func @transform_0(%arg0: i32, %arg1: i32) -> (i32, i32) {
    %c0_i32 = arith.constant 0 : i32
    return %arg0, %arg1 : i32, i32
  }
  func.func @transform_1(%arg0: i32, %arg1: i32) -> (i32, i32) {
    %c0_i32 = arith.constant 0 : i32
    %c0_i32_0 = arith.constant 0 : i32
    %c0_i32_1 = arith.constant 0 : i32
    return %c0_i32, %c0_i32_0 : i32, i32
  }
  func.func @transform_2(%arg0: i32, %arg1: i32) -> (i32, i32) {
    %c0_i32 = arith.constant 0 : i32
    %c0_i32_0 = arith.constant 0 : i32
    return %arg0, %c0_i32 : i32, i32
  }
  func.func @transform_3(%arg0: i32, %arg1: i32) -> (i32, i32) {
    %c0_i32 = arith.constant 0 : i32
    %c0_i32_0 = arith.constant 0 : i32
    return %arg0, %c0_i32 : i32, i32
  }
  func.func @transform_4(%arg0: i32, %arg1: i32) -> (i32, i32) {
    %c0_i32 = arith.constant 0 : i32
    %c0_i32_0 = arith.constant 0 : i32
    return %arg0, %c0_i32 : i32, i32
  }
}

module attributes {stable_mosaic.version = 11 : i64} {
  func.func @_propagate_acc_kernel(%arg0: i32, %arg1: i32, %arg2: memref<128x128xbf16, #tpu.memory_space<vmem>>, %arg3: memref<256x128xbf16, #tpu.memory_space<vmem>>, %arg4: memref<128x128xf32, #tpu.memory_space<vmem>>, %arg5: memref<128x128xbf16, #tpu.memory_space<vmem>>, %arg6: memref<128x128xf32, #tpu.memory_space<vmem>>) attributes {dimension_semantics = [#tpu.dimension_semantics<parallel>, #tpu.dimension_semantics<arbitrary>], iteration_bounds = array<i64: 2, 2>, scalar_prefetch = 0 : i64, scratch_operands = 0 : i64, tpu.core_type = #tpu.core_type<tc>, window_params = [{transform_indices = @transform_0, window_bounds = array<i64: 128, 128>}, {pipeline_mode = #tpu.pipeline_mode<synchronous>, transform_indices = @transform_1, window_bounds = array<i64: 256, 128>}, {transform_indices = @transform_2, window_bounds = array<i64: 128, 128>}, {transform_indices = @transform_3, window_bounds = array<i64: 128, 128>}, {transform_indices = @transform_4, window_bounds = array<i64: 128, 128>}]} {
    %c0_i32 = arith.constant 0 : i32
    %0 = arith.cmpi eq, %arg1, %c0_i32 : i32
    %1 = arith.extui %0 : i1 to i32
    %c0_i32_0 = arith.constant 0 : i32
    %2 = arith.cmpi ne, %1, %c0_i32_0 : i32
    scf.if %2 {
      %cst_8 = arith.constant 0.000000e+00 : f32
      %15 = vector.broadcast %cst_8 : f32 to vector<128x128xf32>
      %c0_9 = arith.constant 0 : index
      %c0_10 = arith.constant 0 : index
      %16 = vector.load %arg6[%c0_9, %c0_10] : memref<128x128xf32, #tpu.memory_space<vmem>>, vector<128x128xf32>
      tpu.vector_store %arg6[%c0_9, %c0_10], %15 {strides = array<i32>} : memref<128x128xf32, #tpu.memory_space<vmem>>, vector<128x128xf32>,
    } else {
    }
    %c128_i32 = arith.constant 128 : i32
    %3 = arith.muli %arg1, %c128_i32 : i32
    %4 = tpu.assume_multiple %3, 128 : i32
    %5 = arith.index_cast %4 : i32 to index
    %c0 = arith.constant 0 : index
    %6 = vector.load %arg3[%5, %c0] : memref<256x128xbf16, #tpu.memory_space<vmem>>, vector<128x128xbf16>
    %c0_1 = arith.constant 0 : index
    %c0_2 = arith.constant 0 : index
    %7 = vector.load %arg6[%c0_1, %c0_2] : memref<128x128xf32, #tpu.memory_space<vmem>>, vector<128x128xf32>
    %c0_3 = arith.constant 0 : index
    %c0_4 = arith.constant 0 : index
    %8 = vector.load %arg2[%c0_3, %c0_4] : memref<128x128xbf16, #tpu.memory_space<vmem>>, vector<128x128xbf16>
    %cst = arith.constant dense<0.000000e+00> : vector<128x128xf32>
    %9 = tpu.matmul %8, %6, %cst {dimension_numbers = #tpu.dot_dimension_numbers<[1], [0], [0], [1], [0, 0, 1, 1], [], []>} : vector<128x128xbf16>, vector<128x128xbf16>, vector<128x128xf32> -> vector<128x128xf32>
    %10 = arith.addf %7, %9 : vector<128x128xf32>
    %c0_5 = arith.constant 0 : index
    %c0_6 = arith.constant 0 : index
    %11 = vector.load %arg6[%c0_5, %c0_6] : memref<128x128xf32, #tpu.memory_space<vmem>>, vector<128x128xf32>
    tpu.vector_store %arg6[%c0_5, %c0_6], %10 {strides = array<i32>} : memref<128x128xf32, #tpu.memory_space<vmem>>, vector<128x128xf32>,
    %c1_i32 = arith.constant 1 : i32
    %12 = arith.cmpi eq, %arg1, %c1_i32 : i32
    %13 = arith.extui %12 : i1 to i32
    %c0_i32_7 = arith.constant 0 : i32
    %14 = arith.cmpi ne, %13, %c0_i32_7 : i32
    scf.if %14 {
      %c0_8 = arith.constant 0 : index
      %c0_9 = arith.constant 0 : index
      %15 = vector.load %arg6[%c0_8, %c0_9] : memref<128x128xf32, #tpu.memory_space<vmem>>, vector<128x128xf32>
      %16 = arith.truncf %15 : vector<128x128xf32> to vector<128x128xbf16>
      %c0_10 = arith.constant 0 : index
      %c0_11 = arith.constant 0 : index
      %17 = vector.load %arg5[%c0_10, %c0_11] : memref<128x128xbf16, #tpu.memory_space<vmem>>, vector<128x128xbf16>
      tpu.vector_store %arg5[%c0_10, %c0_11], %16 {strides = array<i32>} : memref<128x128xbf16, #tpu.memory_space<vmem>>, vector<128x128xbf16>,
      %c0_12 = arith.constant 0 : index
      %c0_13 = arith.constant 0 : index
      %18 = vector.load %arg6[%c0_12, %c0_13] : memref<128x128xf32, #tpu.memory_space<vmem>>, vector<128x128xf32>
      %c0_14 = arith.constant 0 : index
      %c0_15 = arith.constant 0 : index
      %19 = vector.load %arg4[%c0_14, %c0_15] : memref<128x128xf32, #tpu.memory_space<vmem>>, vector<128x128xf32>
      %20 = arith.addf %18, %19 : vector<128x128xf32>
      %c0_16 = arith.constant 0 : index
      %c0_17 = arith.constant 0 : index
      %21 = vector.load %arg6[%c0_16, %c0_17] : memref<128x128xf32, #tpu.memory_space<vmem>>, vector<128x128xf32>
      tpu.vector_store %arg6[%c0_16, %c0_17], %20 {strides = array<i32>} : memref<128x128xf32, #tpu.memory_space<vmem>>, vector<128x128xf32>,
    } else {
    }
    return
  }
  func.func @transform_0(%arg0: i32, %arg1: i32) -> (i32, i32) {
    %c0_i32 = arith.constant 0 : i32
    return %arg0, %arg1 : i32, i32
  }
  func.func @transform_1(%arg0: i32, %arg1: i32) -> (i32, i32) {
    %c0_i32 = arith.constant 0 : i32
    %c0_i32_0 = arith.constant 0 : i32
    %c0_i32_1 = arith.constant 0 : i32
    return %c0_i32, %c0_i32_0 : i32, i32
  }
  func.func @transform_2(%arg0: i32, %arg1: i32) -> (i32, i32) {
    %c0_i32 = arith.constant 0 : i32
    %c0_i32_0 = arith.constant 0 : i32
    return %arg0, %c0_i32 : i32, i32
  }
  func.func @transform_3(%arg0: i32, %arg1: i32) -> (i32, i32) {
    %c0_i32 = arith.constant 0 : i32
    %c0_i32_0 = arith.constant 0 : i32
    return %arg0, %c0_i32 : i32, i32
  }
  func.func @transform_4(%arg0: i32, %arg1: i32) -> (i32, i32) {
    %c0_i32 = arith.constant 0 : i32
    %c0_i32_0 = arith.constant 0 : i32
    return %arg0, %c0_i32 : i32, i32
  }
}

</mosaic_0001>

<llo_original>
// kernel: lightgcn_forward.7
$region0: #{lightgcn_forward.7}
  #allocation0 [shape = 'u32[]', space=smem, size = 0x4, offset = 0x4, fixed_abs, tag = 'smem constant byte address 0x4 - core index']
  #allocation1 [shape = 'u32[72,128]{1,0:T(1,128)}', space=vmem, size = 0x9000, scoped, tag = 'internal scratch']
  %s0 = inlined_call_operand.vmem [shape: bf16[256,256], index: 0, kind: input, shape index: {}]
  %s1 = inlined_call_operand.vmem [shape: bf16[256,128], index: 1, kind: input, shape index: {}]
  %s2 = inlined_call_operand.vmem [shape: f32[256,128], index: 2, kind: input, shape index: {}, may-alias: {2,4}]
  %s3 = inlined_call_operand.vmem [shape: bf16[256,128], index: 3, kind: output, shape index: {0}]
  %s4 = inlined_call_operand.vmem [shape: f32[256,128], index: 4, kind: output, shape index: {1}, may-alias: {2,4}]
  %5 = xla_tuple %s3, %s4
  %s6 = sld [smem:[#allocation0]]
  $region102: #{lightgcn_forward.7} parent=0
    _
  %s8 = ssub.s32 1, %s6
  %s9 = scalar_select 0, %s8, %s6
  $region1: #{lightgcn_forward.7} parent=0
    #allocation2 [shape = 'u8[65536]{0}', space=vmem, size = 0x10000, scoped, tag = 'input window, operand 0']
    loop: start=0, step=1, limit=6
    $region2: #{lightgcn_forward.7} parent=1 // loop_pre_header
      _
    $region3: #{lightgcn_forward.7} parent=1 // loop_header
      %s11 = sphi 0, %s15
      %p12 = scmp.ge.s32.totalorder %s11, 6
      %s18 = sphi 0, %s30
      %s19 = sphi 0, %s26
      %s20 = sphi 0, %s18
      %s21 = sphi 0, %s19
      %s22 = sphi 0, %s20
      %s23 = sphi 0, %s21
      %s35 = sphi 0, %s37
      %s38 = sphi 0, %s35
      %s39 = sphi 0, %s38
      %s55 = sphi 0, %s39
      %s59 = sphi 0, %s59
      %s61 = sphi 0, %s59
      %s62 = sphi 0, %s61
      %s76 = sphi 0, %s62
      %s82 = sphi 0, %s84
      %s85 = sphi 0, %s82
      %s86 = sphi 0, %s85
      %s102 = sphi 0, %s86
      %s108 = sphi 0, %s110
      %s111 = sphi 0, %s108
      %s112 = sphi 0, %s111
      %s128 = sphi 0, %s112
      %s134 = sphi 0, %s136
      %s137 = sphi 0, %s134
      %s138 = sphi 0, %s137
      %s154 = sphi 0, %s138
    $region4: #{lightgcn_forward.7} parent=1 // loop_header_branch
      %14 = sbr.rel (%p12) target = $region8
    $region5: #{lightgcn_forward.7} parent=1 // loop_body
      %s16 = ssub.s32 %s11, 1
      %s17 = ssub.s32 %s11, 2
      %s24 = sadd.s32 1, %s19
      %p25 = scmp.ge.s32.totalorder %s24, 2
      %s26 = scalar_select %p25, 0, %s24
      %s27 = sadd.s32 1, %s18
      %s28 = scalar_select %p25, %s27, %s18
      %p29 = scmp.ge.s32.totalorder %s28, 2
      %s30 = scalar_select %p29, 0, %s28
      %s31 = ssub.s32 %s18, %s30
      %s32 = ssub.s32 %s19, %s26
      %s33 = sor.u32 %s31, %s32
      %p34 = scmp.eq.s32.totalorder %s33, 0
      %s36 = sadd.s32 %s35, 1
      %s37 = scalar_select %p34, %s35, %s36
      %p40 = pneg %p34
      %p41 = scmp.eq.s32.totalorder %s11, 3
      %p42 = por %p40, %p41
      %p43 = scmp.ne.s32.totalorder %s35, %s38
      %p44 = scmp.eq.s32.totalorder %s11, 0
      %p45 = por %p43, %p44
      %p46 = scmp.ne.s32.totalorder %s35, %s38
      %p47 = scmp.eq.s32.totalorder %s16, 3
      %p48 = por %p46, %p47
      %p49 = scmp.ne.s32.totalorder %s38, %s39
      %p50 = scmp.eq.s32.totalorder %s16, 0
      %p51 = por %p49, %p50
      %p52 = scmp.ne.s32.totalorder %s38, %s39
      %p53 = scmp.eq.s32.totalorder %s17, 3
      %p54 = por %p52, %p53
      %p56 = scmp.ne.s32.totalorder %s39, %s55
      %p57 = scmp.eq.s32.totalorder %s17, 0
      %p58 = por %p56, %p57
      %s60 = sadd.s32 %s59, 1
      %p63 = scmp.eq.s32.totalorder %s11, 3
      %p64 = scmp.ne.s32.totalorder %s59, %s61
      %p65 = scmp.eq.s32.totalorder %s11, 0
      %p66 = por %p64, %p65
      %p67 = scmp.ne.s32.totalorder %s59, %s61
      %p68 = scmp.eq.s32.totalorder %s16, 3
      %p69 = por %p67, %p68
      %p70 = scmp.ne.s32.totalorder %s61, %s62
      %p71 = scmp.eq.s32.totalorder %s16, 0
      %p72 = por %p70, %p71
      %p73 = scmp.ne.s32.totalorder %s61, %s62
      %p74 = scmp.eq.s32.totalorder %s17, 3
      %p75 = por %p73, %p74
      %p77 = scmp.ne.s32.totalorder %s62, %s76
      %p78 = scmp.eq.s32.totalorder %s17, 0
      %p79 = por %p77, %p78
      %s80 = ssub.s32 %s18, %s30
      %p81 = scmp.eq.s32.totalorder %s80, 0
      %s83 = sadd.s32 %s82, 1
      %s84 = scalar_select %p81, %s82, %s83
      %p87 = pneg %p81
      %p88 = scmp.eq.s32.totalorder %s11, 3
      %p89 = por %p87, %p88
      %p90 = scmp.ne.s32.totalorder %s82, %s85
      %p91 = scmp.eq.s32.totalorder %s11, 0
      %p92 = por %p90, %p91
      %p93 = scmp.ne.s32.totalorder %s82, %s85
      %p94 = scmp.eq.s32.totalorder %s16, 3
      %p95 = por %p93, %p94
      %p96 = scmp.ne.s32.totalorder %s85, %s86
      %p97 = scmp.eq.s32.totalorder %s16, 0
      %p98 = por %p96, %p97
      %p99 = scmp.ne.s32.totalorder %s85, %s86
      %p100 = scmp.eq.s32.totalorder %s17, 3
      %p101 = por %p99, %p100
      %p103 = scmp.ne.s32.totalorder %s86, %s102
      %p104 = scmp.eq.s32.totalorder %s17, 0
      %p105 = por %p103, %p104
      %s106 = ssub.s32 %s18, %s30
      %p107 = scmp.eq.s32.totalorder %s106, 0
      %s109 = sadd.s32 %s108, 1
      %s110 = scalar_select %p107, %s108, %s109
      %p113 = pneg %p107
      %p114 = scmp.eq.s32.totalorder %s11, 3
      %p115 = por %p113, %p114
      %p116 = scmp.ne.s32.totalorder %s108, %s111
      %p117 = scmp.eq.s32.totalorder %s11, 0
      %p118 = por %p116, %p117
      %p119 = scmp.ne.s32.totalorder %s108, %s111
      %p120 = scmp.eq.s32.totalorder %s16, 3
      %p121 = por %p119, %p120
      %p122 = scmp.ne.s32.totalorder %s111, %s112
      %p123 = scmp.eq.s32.totalorder %s16, 0
      %p124 = por %p122, %p123
      %p125 = scmp.ne.s32.totalorder %s111, %s112
      %p126 = scmp.eq.s32.totalorder %s17, 3
      %p127 = por %p125, %p126
      %p129 = scmp.ne.s32.totalorder %s112, %s128
      %p130 = scmp.eq.s32.totalorder %s17, 0
      %p131 = por %p129, %p130
      %s132 = ssub.s32 %s18, %s30
      %p133 = scmp.eq.s32.totalorder %s132, 0
      %s135 = sadd.s32 %s134, 1
      %s136 = scalar_select %p133, %s134, %s135
      %p139 = pneg %p133
      %p140 = scmp.eq.s32.totalorder %s11, 3
      %p141 = por %p139, %p140
      %p142 = scmp.ne.s32.totalorder %s134, %s137
      %p143 = scmp.eq.s32.totalorder %s11, 0
      %p144 = por %p142, %p143
      %p145 = scmp.ne.s32.totalorder %s134, %s137
      %p146 = scmp.eq.s32.totalorder %s16, 3
      %p147 = por %p145, %p146
      %p148 = scmp.ne.s32.totalorder %s137, %s138
      %p149 = scmp.eq.s32.totalorder %s16, 0
      %p150 = por %p148, %p149
      %p151 = scmp.ne.s32.totalorder %s137, %s138
      %p152 = scmp.eq.s32.totalorder %s17, 3
      %p153 = por %p151, %p152
      %p155 = scmp.ne.s32.totalorder %s138, %s154
      %p156 = scmp.eq.s32.totalorder %s17, 0
      %p157 = por %p155, %p156
      %p158 = scmp.le.s32.totalorder 1, %s11
      %p159 = scmp.lt.s32.totalorder %s11, 5
      %p160 = pnand %p158, %p159
      %p161 = pneg %p160
      // Predicated region
      $region9: #{lightgcn_forward.7} parent=5 // pred_check
        _
      $region10: #{lightgcn_forward.7} parent=5 // pred_check_branch
        %163 = sbr.rel (%p160) target = $region12
      $region11: #{lightgcn_forward.7} parent=5 // pred_region
        %s164 = ssub.s32 %s11, 1
        // Predicated region
        $region13: #{lightgcn_forward.7} parent=11 // pred_check
          %p165 = pneg %p72
        $region14: #{lightgcn_forward.7} parent=11 // pred_check_branch
          %167 = sbr.rel (%p165) target = $region16
        $region15: #{lightgcn_forward.7} parent=11 // pred_region
          _
        $region16: #{lightgcn_forward.7} parent=11 // pred_fallthru
          _
      $region12: #{lightgcn_forward.7} parent=5 // pred_fallthru
        _
      %p168 = scmp.lt.s32.totalorder %s11, 4
      // Predicated region
      $region17: #{lightgcn_forward.7} parent=5 // pred_check
        %p169 = pneg %p168
      $region18: #{lightgcn_forward.7} parent=5 // pred_check_branch
        %171 = sbr.rel (%p169) target = $region20
      $region19: #{lightgcn_forward.7} parent=5 // pred_region
        // Predicated region
        $region21: #{lightgcn_forward.7} parent=19 // pred_check
          %p172 = pneg %p45
        $region22: #{lightgcn_forward.7} parent=19 // pred_check_branch
          %174 = sbr.rel (%p172) target = $region24
        $region23: #{lightgcn_forward.7} parent=19 // pred_region
          %s175 = sand.u32 %s35, 1
          %s176 = sand.u32 %s35, 1
          %s177 = smul.addr %s176, 64
          %s178 = scalar_lea.vmem [#allocation2], %s177
          %s179 = smul.u32 16, %s18
          %s180 = smul.addr %s179, 2
          %s181 = sadd.s32 %s19, %s180
          %s182 = smul.addr %s181, 4
          %s183 = scalar_lea.vmem %s0, %s182
          // Predicated region
          $region25: #{lightgcn_forward.7} parent=23 // pred_check
            _
          $region26: #{lightgcn_forward.7} parent=23 // pred_check_branch
            %185 = sbr.rel (0) target = $region28
          $region27: #{lightgcn_forward.7} parent=23 // pred_region
            // Predicated region
            $region29: #{lightgcn_forward.7} parent=27 // pred_check
              _
            $region30: #{lightgcn_forward.7} parent=27 // pred_check_branch
              %187 = sbr.rel target = $region32
            $region31: #{lightgcn_forward.7} parent=27 // pred_region
              // Predicated region
              $region44: #{lightgcn_forward.7} parent=31 // pred_check
                _
              $region45: #{lightgcn_forward.7} parent=31 // pred_check_branch
                %233 = sbr.rel (0) target = $region47
              $region46: #{lightgcn_forward.7} parent=31 // pred_region
                loop: start=0, step=1, limit=1
                $region48: #{lightgcn_forward.7} parent=46 // loop_pre_header
                  _
                $region49: #{lightgcn_forward.7} parent=46 // loop_header
                  %s235 = sphi 0, %s239
                  %p236 = scmp.ge.s32.totalorder %s235, 1
                  %s240 = sphi %s183, %s183
                  %s241 = sphi %s178, %s178
                $region50: #{lightgcn_forward.7} parent=46 // loop_header_branch
                  %238 = sbr.rel (%p236) target = $region54
                $region51: #{lightgcn_forward.7} parent=46 // loop_body
                  _
                $region52: #{lightgcn_forward.7} parent=46 // loop_footer
                  %s239 = sadd.s32 1, %s235
                $region53: #{lightgcn_forward.7} parent=46 // loop_footer_branch
                  %234 = sbr.rel target = $region49
                $region54: #{lightgcn_forward.7} parent=46 // loop_exit
                  _
                %s243 = ssub.s32 16, 1
                loop: start=0, step=1, limit=1
                $region55: #{lightgcn_forward.7} parent=46 // loop_pre_header
                  _
                $region56: #{lightgcn_forward.7} parent=46 // loop_header
                  %s245 = sphi 0, %s249
                  %p246 = scmp.ge.s32.totalorder %s245, 1
                  %s250 = sphi %s183, %s183
                  %s251 = sphi %s178, %s178
                $region57: #{lightgcn_forward.7} parent=46 // loop_header_branch
                  %248 = sbr.rel (%p246) target = $region61
                $region58: #{lightgcn_forward.7} parent=46 // loop_body
                  %v252 = vld [vmem:[%s250] sm:%s243]
                  %253 = vst [vmem:[%s251] sm:%s243] %v252
                  %v254 = vld [vmem:[%s250 + $0x8] sm:%s243]
                  %255 = vst [vmem:[%s251 + $0x4] sm:%s243] %v254
                  %v256 = vld [vmem:[%s250 + $0x10] sm:%s243]
                  %257 = vst [vmem:[%s251 + $0x8] sm:%s243] %v256
                  %v258 = vld [vmem:[%s250 + $0x18] sm:%s243]
                  %259 = vst [vmem:[%s251 + $0xc] sm:%s243] %v258
                  %v260 = vld [vmem:[%s250 + $0x20] sm:%s243]
                  %261 = vst [vmem:[%s251 + $0x10] sm:%s243] %v260
                  %v262 = vld [vmem:[%s250 + $0x28] sm:%s243]
                  %263 = vst [vmem:[%s251 + $0x14] sm:%s243] %v262
                  %v264 = vld [vmem:[%s250 + $0x30] sm:%s243]
                  %265 = vst [vmem:[%s251 + $0x18] sm:%s243] %v264
                  %v266 = vld [vmem:[%s250 + $0x38] sm:%s243]
                  %267 = vst [vmem:[%s251 + $0x1c] sm:%s243] %v266
                  %v268 = vld [vmem:[%s250 + $0x40] sm:%s243]
                  %269 = vst [vmem:[%s251 + $0x20] sm:%s243] %v268
                  %v270 = vld [vmem:[%s250 + $0x48] sm:%s243]
                  %271 = vst [vmem:[%s251 + $0x24] sm:%s243] %v270
                  %v272 = vld [vmem:[%s250 + $0x50] sm:%s243]
                  %273 = vst [vmem:[%s251 + $0x28] sm:%s243] %v272
                  %v274 = vld [vmem:[%s250 + $0x58] sm:%s243]
                  %275 = vst [vmem:[%s251 + $0x2c] sm:%s243] %v274
                  %v276 = vld [vmem:[%s250 + $0x60] sm:%s243]
                  %277 = vst [vmem:[%s251 + $0x30] sm:%s243] %v276
                  %v278 = vld [vmem:[%s250 + $0x68] sm:%s243]
                  %279 = vst [vmem:[%s251 + $0x34] sm:%s243] %v278
                  %v280 = vld [vmem:[%s250 + $0x70] sm:%s243]
                  %281 = vst [vmem:[%s251 + $0x38] sm:%s243] %v280
                  %v282 = vld [vmem:[%s250 + $0x78] sm:%s243]
                  %283 = vst [vmem:[%s251 + $0x3c] sm:%s243] %v282
                $region59: #{lightgcn_forward.7} parent=46 // loop_footer
                  %s249 = sadd.s32 1, %s245
                $region60: #{lightgcn_forward.7} parent=46 // loop_footer_branch
                  %244 = sbr.rel target = $region56
                $region61: #{lightgcn_forward.7} parent=46 // loop_exit
                  _
              $region47: #{lightgcn_forward.7} parent=31 // pred_fallthru
                _
            $region32: #{lightgcn_forward.7} parent=27 // pred_fallthru
              _
            // Predicated region
            $region33: #{lightgcn_forward.7} parent=27 // pred_check
              _
            $region34: #{lightgcn_forward.7} parent=27 // pred_check_branch
              %189 = sbr.rel (0) target = $region36
            $region35: #{lightgcn_forward.7} parent=27 // pred_region
              %s191 = ssub.s32 16, 1
              loop: start=0, step=1, limit=1
              $region37: #{lightgcn_forward.7} parent=35 // loop_pre_header
                _
              $region38: #{lightgcn_forward.7} parent=35 // loop_header
                %s193 = sphi 0, %s197
                %p194 = scmp.ge.s32.totalorder %s193, 1
                %s198 = sphi %s183, %s183
                %s199 = sphi %s178, %s178
              $region39: #{lightgcn_forward.7} parent=35 // loop_header_branch
                %196 = sbr.rel (%p194) target = $region43
              $region40: #{lightgcn_forward.7} parent=35 // loop_body
                %v200 = vld [vmem:[%s198] sm:%s191]
                %201 = vst [vmem:[%s199] sm:%s191] %v200
                %v202 = vld [vmem:[%s198 + $0x8] sm:%s191]
                %203 = vst [vmem:[%s199 + $0x4] sm:%s191] %v202
                %v204 = vld [vmem:[%s198 + $0x10] sm:%s191]
                %205 = vst [vmem:[%s199 + $0x8] sm:%s191] %v204
                %v206 = vld [vmem:[%s198 + $0x18] sm:%s191]
                %207 = vst [vmem:[%s199 + $0xc] sm:%s191] %v206
                %v208 = vld [vmem:[%s198 + $0x20] sm:%s191]
                %209 = vst [vmem:[%s199 + $0x10] sm:%s191] %v208
                %v210 = vld [vmem:[%s198 + $0x28] sm:%s191]
                %211 = vst [vmem:[%s199 + $0x14] sm:%s191] %v210
                %v212 = vld [vmem:[%s198 + $0x30] sm:%s191]
                %213 = vst [vmem:[%s199 + $0x18] sm:%s191] %v212
                %v214 = vld [vmem:[%s198 + $0x38] sm:%s191]
                %215 = vst [vmem:[%s199 + $0x1c] sm:%s191] %v214
                %v216 = vld [vmem:[%s198 + $0x40] sm:%s191]
                %217 = vst [vmem:[%s199 + $0x20] sm:%s191] %v216
                %v218 = vld [vmem:[%s198 + $0x48] sm:%s191]
                %219 = vst [vmem:[%s199 + $0x24] sm:%s191] %v218
                %v220 = vld [vmem:[%s198 + $0x50] sm:%s191]
                %221 = vst [vmem:[%s199 + $0x28] sm:%s191] %v220
                %v222 = vld [vmem:[%s198 + $0x58] sm:%s191]
                %223 = vst [vmem:[%s199 + $0x2c] sm:%s191] %v222
                %v224 = vld [vmem:[%s198 + $0x60] sm:%s191]
                %225 = vst [vmem:[%s199 + $0x30] sm:%s191] %v224
                %v226 = vld [vmem:[%s198 + $0x68] sm:%s191]
                %227 = vst [vmem:[%s199 + $0x34] sm:%s191] %v226
                %v228 = vld [vmem:[%s198 + $0x70] sm:%s191]
                %229 = vst [vmem:[%s199 + $0x38] sm:%s191] %v228
                %v230 = vld [vmem:[%s198 + $0x78] sm:%s191]
                %231 = vst [vmem:[%s199 + $0x3c] sm:%s191] %v230
              $region41: #{lightgcn_forward.7} parent=35 // loop_footer
                %s197 = sadd.s32 1, %s193
              $region42: #{lightgcn_forward.7} parent=35 // loop_footer_branch
                %192 = sbr.rel target = $region38
              $region43: #{lightgcn_forward.7} parent=35 // loop_exit
                _
            $region36: #{lightgcn_forward.7} parent=27 // pred_fallthru
              _
          $region28: #{lightgcn_forward.7} parent=23 // pred_fallthru
            _
          %284 = vnop
        $region24: #{lightgcn_forward.7} parent=19 // pred_fallthru
          _
        // Predicated region
        $region62: #{lightgcn_forward.7} parent=19 // pred_check
          %p285 = pneg %p92
        $region63: #{lightgcn_forward.7} parent=19 // pred_check_branch
          %287 = sbr.rel (%p285) target = $region65
        $region64: #{lightgcn_forward.7} parent=19 // pred_region
          %s288 = smul.u32 16, %s18
          %p289 = scmp.lt.s32.totalorder %s288, 31
          %s290 = scalar_select %p289, %s288, 31
          %s291 = smul.addr %s290, 8
          %s292 = scalar_lea.vmem %s2, %s291
          %s293 = smul.u32 16, %s18
        $region65: #{lightgcn_forward.7} parent=19 // pred_fallthru
          _
      $region20: #{lightgcn_forward.7} parent=5 // pred_fallthru
        _
      %p294 = scmp.le.s32.totalorder 1, %s11
      %p295 = scmp.lt.s32.totalorder %s11, 5
      %p296 = pnand %p294, %p295
      %p297 = pneg %p296
      // Predicated region
      $region66: #{lightgcn_forward.7} parent=5 // pred_check
        _
      $region67: #{lightgcn_forward.7} parent=5 // pred_check_branch
        %299 = sbr.rel (%p296) target = $region69
      $region68: #{lightgcn_forward.7} parent=5 // pred_region
        %s300 = ssub.s32 %s11, 1
        %s301 = sand.u32 %s38, 1
        %s302 = sand.u32 %s38, 1
        %s303 = smul.addr %s302, 64
        %s304 = scalar_lea.vmem [#allocation2], %s303
        // Predicated region
        $region70: #{lightgcn_forward.7} parent=68 // pred_check
          %p305 = pneg %p51
        $region71: #{lightgcn_forward.7} parent=68 // pred_check_branch
          %307 = sbr.rel (%p305) target = $region73
        $region72: #{lightgcn_forward.7} parent=68 // pred_region
          _
        $region73: #{lightgcn_forward.7} parent=68 // pred_fallthru
          _
        %s308 = sand.u32 %s38, 1
        %s309 = sand.u32 %s38, 1
        %s310 = smul.addr %s309, 64
        %s311 = scalar_lea.vmem [#allocation2], %s310
        %p312 = pneg %p51
        %p313 = pneg %p48
        %p314 = pneg %p72
        %p315 = pneg %p69
        %s316 = smul.u32 16, %s20
        %p317 = scmp.lt.s32.totalorder %s316, 31
        %s318 = scalar_select %p317, %s316, 31
        %s319 = smul.addr %s318, 8
        %s320 = scalar_lea.vmem %s2, %s319
        %p321 = pneg %p98
        %p322 = pneg %p95
        %p323 = pneg %p124
        %p324 = pneg %p121
        %s325 = smul.u32 16, %s20
        %p326 = scmp.lt.s32.totalorder %s325, 31
        %s327 = scalar_select %p326, %s325, 31
        %s328 = smul.addr %s327, 4
        %s329 = scalar_lea.vmem %s3, %s328
        %p330 = pneg %p150
        %p331 = pneg %p147
        %s332 = smul.u32 16, %s20
        %p333 = scmp.lt.s32.totalorder %s332, 31
        %s334 = scalar_select %p333, %s332, 31
        %s335 = smul.addr %s334, 8
        %s336 = scalar_lea.vmem %s4, %s335
        %s337 = smul.u32 16, %s20
        %s338 = smul.u32 16, %s20
        %p339 = scmp.lt.s32.totalorder %s338, 31
        %s340 = scalar_select %p339, %s338, 31
        %s341 = smul.addr %s340, 8
        %s342 = scalar_lea.vmem %s2, %s341
        %s343 = smul.u32 16, %s20
        %s344 = smul.u32 16, %s20
        %p345 = scmp.lt.s32.totalorder %s344, 31
        %s346 = scalar_select %p345, %s344, 31
        %s347 = smul.addr %s346, 4
        %s348 = scalar_lea.vmem %s3, %s347
        %s349 = smul.u32 16, %s20
        %s350 = smul.u32 16, %s20
        %p351 = scmp.lt.s32.totalorder %s350, 31
        %s352 = scalar_select %p351, %s350, 31
        %s353 = smul.addr %s352, 8
        %s354 = scalar_lea.vmem %s4, %s353
        %s355 = smul.u32 16, %s20
        %p356 = scmp.eq.s32.totalorder %s21, 0
        // Predicated region
        $region74: #{lightgcn_forward.7} parent=68 // pred_check
          %p357 = pneg %p356
        $region75: #{lightgcn_forward.7} parent=68 // pred_check_branch
          %359 = sbr.rel (%p357) target = $region77
        $region76: #{lightgcn_forward.7} parent=68 // pred_region
          %360 = vst [vmem:[%s354] sm:$0xff] 0.0
          %361 = vst [vmem:[%s354 + $0x8] sm:$0xff] 0.0
          %362 = vst [vmem:[%s354 + $0x10] sm:$0xff] 0.0
          %363 = vst [vmem:[%s354 + $0x18] sm:$0xff] 0.0
          %364 = vst [vmem:[%s354 + $0x20] sm:$0xff] 0.0
          %365 = vst [vmem:[%s354 + $0x28] sm:$0xff] 0.0
          %366 = vst [vmem:[%s354 + $0x30] sm:$0xff] 0.0
          %367 = vst [vmem:[%s354 + $0x38] sm:$0xff] 0.0
          %368 = vst [vmem:[%s354 + $0x40] sm:$0xff] 0.0
          %369 = vst [vmem:[%s354 + $0x48] sm:$0xff] 0.0
          %370 = vst [vmem:[%s354 + $0x50] sm:$0xff] 0.0
          %371 = vst [vmem:[%s354 + $0x58] sm:$0xff] 0.0
          %372 = vst [vmem:[%s354 + $0x60] sm:$0xff] 0.0
          %373 = vst [vmem:[%s354 + $0x68] sm:$0xff] 0.0
          %374 = vst [vmem:[%s354 + $0x70] sm:$0xff] 0.0
          %375 = vst [vmem:[%s354 + $0x78] sm:$0xff] 0.0
        $region77: #{lightgcn_forward.7} parent=68 // pred_fallthru
          _
        %s376 = smul.u32 %s21, 128
        %s377 = sshra.s32 %s376, 3
        %s378 = sand.u32 %s376, 7
        %s379 = smul.addr %s377, 4
        %s380 = scalar_lea.vmem %s1, %s379
        %v381 = vld [vmem:[%s380] sm:$0xf]
        %v382 = vld [vmem:[%s380 + $0x4] sm:$0xf]
        %v383 = vld [vmem:[%s380 + $0x8] sm:$0xf]
        %v384 = vld [vmem:[%s380 + $0xc] sm:$0xf]
        %v385 = vld [vmem:[%s380 + $0x10] sm:$0xf]
        %v386 = vld [vmem:[%s380 + $0x14] sm:$0xf]
        %v387 = vld [vmem:[%s380 + $0x18] sm:$0xf]
        %v388 = vld [vmem:[%s380 + $0x1c] sm:$0xf]
        %v389 = vld [vmem:[%s380 + $0x20] sm:$0xf]
        %v390 = vld [vmem:[%s380 + $0x24] sm:$0xf]
        %v391 = vld [vmem:[%s380 + $0x28] sm:$0xf]
        %v392 = vld [vmem:[%s380 + $0x2c] sm:$0xf]
        %v393 = vld [vmem:[%s380 + $0x30] sm:$0xf]
        %v394 = vld [vmem:[%s380 + $0x34] sm:$0xf]
        %v395 = vld [vmem:[%s380 + $0x38] sm:$0xf]
        %v396 = vld [vmem:[%s380 + $0x3c] sm:$0xf]
        %v397 = vld [vmem:[%s354] sm:$0xff]
        %v398 = vld [vmem:[%s354 + $0x8] sm:$0xff]
        %v399 = vld [vmem:[%s354 + $0x10] sm:$0xff]
        %v400 = vld [vmem:[%s354 + $0x18] sm:$0xff]
        %v401 = vld [vmem:[%s354 + $0x20] sm:$0xff]
        %v402 = vld [vmem:[%s354 + $0x28] sm:$0xff]
        %v403 = vld [vmem:[%s354 + $0x30] sm:$0xff]
        %v404 = vld [vmem:[%s354 + $0x38] sm:$0xff]
        %v405 = vld [vmem:[%s354 + $0x40] sm:$0xff]
        %v406 = vld [vmem:[%s354 + $0x48] sm:$0xff]
        %v407 = vld [vmem:[%s354 + $0x50] sm:$0xff]
        %v408 = vld [vmem:[%s354 + $0x58] sm:$0xff]
        %v409 = vld [vmem:[%s354 + $0x60] sm:$0xff]
        %v410 = vld [vmem:[%s354 + $0x68] sm:$0xff]
        %v411 = vld [vmem:[%s354 + $0x70] sm:$0xff]
        %v412 = vld [vmem:[%s354 + $0x78] sm:$0xff]
        %v413 = vld [vmem:[%s304] sm:$0xf]
        %v414 = vld [vmem:[%s304 + $0x4] sm:$0xf]
        %v415 = vld [vmem:[%s304 + $0x8] sm:$0xf]
        %v416 = vld [vmem:[%s304 + $0xc] sm:$0xf]
        %v417 = vld [vmem:[%s304 + $0x10] sm:$0xf]
        %v418 = vld [vmem:[%s304 + $0x14] sm:$0xf]
        %v419 = vld [vmem:[%s304 + $0x18] sm:$0xf]
        %v420 = vld [vmem:[%s304 + $0x1c] sm:$0xf]
        %v421 = vld [vmem:[%s304 + $0x20] sm:$0xf]
        %v422 = vld [vmem:[%s304 + $0x24] sm:$0xf]
        %v423 = vld [vmem:[%s304 + $0x28] sm:$0xf]
        %v424 = vld [vmem:[%s304 + $0x2c] sm:$0xf]
        %v425 = vld [vmem:[%s304 + $0x30] sm:$0xf]
        %v426 = vld [vmem:[%s304 + $0x34] sm:$0xf]
        %v427 = vld [vmem:[%s304 + $0x38] sm:$0xf]
        %v428 = vld [vmem:[%s304 + $0x3c] sm:$0xf]
        %v445 = vunpack.c.l.b16 %v413
        %v446 = vunpack.c.l.b16 %v414
        %v447 = vunpack.c.l.b16 %v415
        %v448 = vunpack.c.l.b16 %v416
        %v449 = vunpack.c.l.b16 %v417
        %v450 = vunpack.c.l.b16 %v418
        %v451 = vunpack.c.l.b16 %v419
        %v452 = vunpack.c.l.b16 %v420
        %v453 = vunpack.c.l.b16 %v421
        %v454 = vunpack.c.l.b16 %v422
        %v455 = vunpack.c.l.b16 %v423
        %v456 = vunpack.c.l.b16 %v424
        %v457 = vunpack.c.l.b16 %v425
        %v458 = vunpack.c.l.b16 %v426
        %v459 = vunpack.c.l.b16 %v427
        %v460 = vunpack.c.l.b16 %v428
        %v461 = vpack.c.b16 %v446, %v445
        %v462 = vpack.c.b16 %v448, %v447
        %v463 = vpack.c.b16 %v450, %v449
        %v464 = vpack.c.b16 %v452, %v451
        %v465 = vpack.c.b16 %v454, %v453
        %v466 = vpack.c.b16 %v456, %v455
        %v467 = vpack.c.b16 %v458, %v457
        %v468 = vpack.c.b16 %v460, %v459
        %v493 = vunpack.c.l.b16 %v381
        %v494 = vunpack.c.l.b16 %v382
        %v495 = vunpack.c.l.b16 %v383
        %v496 = vunpack.c.l.b16 %v384
        %v497 = vunpack.c.l.b16 %v385
        %v498 = vunpack.c.l.b16 %v386
        %v499 = vunpack.c.l.b16 %v387
        %v500 = vunpack.c.l.b16 %v388
        %v501 = vunpack.c.l.b16 %v389
        %v502 = vunpack.c.l.b16 %v390
        %v503 = vunpack.c.l.b16 %v391
        %v504 = vunpack.c.l.b16 %v392
        %v505 = vunpack.c.l.b16 %v393
        %v506 = vunpack.c.l.b16 %v394
        %v507 = vunpack.c.l.b16 %v395
        %v508 = vunpack.c.l.b16 %v396
        %v509 = vpack.c.b16 %v494, %v493
        %v510 = vpack.c.b16 %v496, %v495
        %v511 = vpack.c.b16 %v498, %v497
        %v512 = vpack.c.b16 %v500, %v499
        %v513 = vpack.c.b16 %v502, %v501
        %v514 = vpack.c.b16 %v504, %v503
        %v515 = vpack.c.b16 %v506, %v505
        %v516 = vpack.c.b16 %v508, %v507
        %525 = vmatpush.bf16.msra.mxu0 %v516
        %526 = vmatpush.bf16.msra.mxu0 %v515
        %527 = vmatpush.bf16.msra.mxu0 %v514
        %528 = vmatpush.bf16.msra.mxu0 %v513
        %529 = vmatpush.bf16.msra.mxu0 %v512
        %530 = vmatpush.bf16.msra.mxu0 %v511
        %531 = vmatpush.bf16.msra.mxu0 %v510
        %532 = vmatpush.bf16.msra.mxu0 %v509
        %533 = vmatmul.bf16.gmra.mxu0 %v461
        %v534 = vpop.f32.mrf.mxu0
        %v535 = vadd.f32 0.0, %v534
        %v536 = vpop.f32.mrf.mxu0
        %v537 = vadd.f32 0.0, %v536
        %538 = vmatmul.bf16.gmra.mxu0 %v462
        %v539 = vpop.f32.mrf.mxu0
        %v540 = vadd.f32 0.0, %v539
        %v541 = vpop.f32.mrf.mxu0
        %v542 = vadd.f32 0.0, %v541
        %543 = vmatmul.bf16.gmra.mxu0 %v463
        %v544 = vpop.f32.mrf.mxu0
        %v545 = vadd.f32 0.0, %v544
        %v546 = vpop.f32.mrf.mxu0
        %v547 = vadd.f32 0.0, %v546
        %548 = vmatmul.bf16.gmra.mxu0 %v464
        %v549 = vpop.f32.mrf.mxu0
        %v550 = vadd.f32 0.0, %v549
        %v551 = vpop.f32.mrf.mxu0
        %v552 = vadd.f32 0.0, %v551
        %553 = vmatmul.bf16.gmra.mxu0 %v465
        %v554 = vpop.f32.mrf.mxu0
        %v555 = vadd.f32 0.0, %v554
        %v556 = vpop.f32.mrf.mxu0
        %v557 = vadd.f32 0.0, %v556
        %558 = vmatmul.bf16.gmra.mxu0 %v466
        %v559 = vpop.f32.mrf.mxu0
        %v560 = vadd.f32 0.0, %v559
        %v561 = vpop.f32.mrf.mxu0
        %v562 = vadd.f32 0.0, %v561
        %563 = vmatmul.bf16.gmra.mxu0 %v467
        %v564 = vpop.f32.mrf.mxu0
        %v565 = vadd.f32 0.0, %v564
        %v566 = vpop.f32.mrf.mxu0
        %v567 = vadd.f32 0.0, %v566
        %568 = vmatmul.bf16.gmra.mxu0 %v468
        %v569 = vpop.f32.mrf.mxu0
        %v570 = vadd.f32 0.0, %v569
        %v571 = vpop.f32.mrf.mxu0
        %v572 = vadd.f32 0.0, %v571
        %573 = vdwg.mxu0
        %v574 = vadd.f32 %v397, %v535
        %v575 = vadd.f32 %v398, %v537
        %v576 = vadd.f32 %v399, %v540
        %v577 = vadd.f32 %v400, %v542
        %v578 = vadd.f32 %v401, %v545
        %v579 = vadd.f32 %v402, %v547
        %v580 = vadd.f32 %v403, %v550
        %v581 = vadd.f32 %v404, %v552
        %v582 = vadd.f32 %v405, %v555
        %v583 = vadd.f32 %v406, %v557
        %v584 = vadd.f32 %v407, %v560
        %v585 = vadd.f32 %v408, %v562
        %v586 = vadd.f32 %v409, %v565
        %v587 = vadd.f32 %v410, %v567
        %v588 = vadd.f32 %v411, %v570
        %v589 = vadd.f32 %v412, %v572
        %590 = vst [vmem:[%s354] sm:$0xff] %v574
        %591 = vst [vmem:[%s354 + $0x8] sm:$0xff] %v575
        %592 = vst [vmem:[%s354 + $0x10] sm:$0xff] %v576
        %593 = vst [vmem:[%s354 + $0x18] sm:$0xff] %v577
        %594 = vst [vmem:[%s354 + $0x20] sm:$0xff] %v578
        %595 = vst [vmem:[%s354 + $0x28] sm:$0xff] %v579
        %596 = vst [vmem:[%s354 + $0x30] sm:$0xff] %v580
        %597 = vst [vmem:[%s354 + $0x38] sm:$0xff] %v581
        %598 = vst [vmem:[%s354 + $0x40] sm:$0xff] %v582
        %599 = vst [vmem:[%s354 + $0x48] sm:$0xff] %v583
        %600 = vst [vmem:[%s354 + $0x50] sm:$0xff] %v584
        %601 = vst [vmem:[%s354 + $0x58] sm:$0xff] %v585
        %602 = vst [vmem:[%s354 + $0x60] sm:$0xff] %v586
        %603 = vst [vmem:[%s354 + $0x68] sm:$0xff] %v587
        %604 = vst [vmem:[%s354 + $0x70] sm:$0xff] %v588
        %605 = vst [vmem:[%s354 + $0x78] sm:$0xff] %v589
        %p606 = scmp.eq.s32.totalorder %s21, 1
        // Predicated region
        $region78: #{lightgcn_forward.7} parent=68 // pred_check
          %p607 = pneg %p606
        $region79: #{lightgcn_forward.7} parent=68 // pred_check_branch
          %609 = sbr.rel (%p607) target = $region81
        $region80: #{lightgcn_forward.7} parent=68 // pred_region
          %v610 = vld [vmem:[%s354] sm:$0xff]
          %v611 = vld [vmem:[%s354 + $0x8] sm:$0xff]
          %v612 = vld [vmem:[%s354 + $0x10] sm:$0xff]
          %v613 = vld [vmem:[%s354 + $0x18] sm:$0xff]
          %v614 = vld [vmem:[%s354 + $0x20] sm:$0xff]
          %v615 = vld [vmem:[%s354 + $0x28] sm:$0xff]
          %v616 = vld [vmem:[%s354 + $0x30] sm:$0xff]
          %v617 = vld [vmem:[%s354 + $0x38] sm:$0xff]
          %v618 = vld [vmem:[%s354 + $0x40] sm:$0xff]
          %v619 = vld [vmem:[%s354 + $0x48] sm:$0xff]
          %v620 = vld [vmem:[%s354 + $0x50] sm:$0xff]
          %v621 = vld [vmem:[%s354 + $0x58] sm:$0xff]
          %v622 = vld [vmem:[%s354 + $0x60] sm:$0xff]
          %v623 = vld [vmem:[%s354 + $0x68] sm:$0xff]
          %v624 = vld [vmem:[%s354 + $0x70] sm:$0xff]
          %v625 = vld [vmem:[%s354 + $0x78] sm:$0xff]
          %v626 = vpack.c.bf16 %v610, %v610
          %v627 = vpack.c.bf16 %v611, %v611
          %v628 = vpack.c.bf16 %v612, %v612
          %v629 = vpack.c.bf16 %v613, %v613
          %v630 = vpack.c.bf16 %v614, %v614
          %v631 = vpack.c.bf16 %v615, %v615
          %v632 = vpack.c.bf16 %v616, %v616
          %v633 = vpack.c.bf16 %v617, %v617
          %v634 = vpack.c.bf16 %v618, %v618
          %v635 = vpack.c.bf16 %v619, %v619
          %v636 = vpack.c.bf16 %v620, %v620
          %v637 = vpack.c.bf16 %v621, %v621
          %v638 = vpack.c.bf16 %v622, %v622
          %v639 = vpack.c.bf16 %v623, %v623
          %v640 = vpack.c.bf16 %v624, %v624
          %v641 = vpack.c.bf16 %v625, %v625
          %642 = vst [vmem:[%s348] sm:$0xf] %v626
          %643 = vst [vmem:[%s348 + $0x4] sm:$0xf] %v627
          %644 = vst [vmem:[%s348 + $0x8] sm:$0xf] %v628
          %645 = vst [vmem:[%s348 + $0xc] sm:$0xf] %v629
          %646 = vst [vmem:[%s348 + $0x10] sm:$0xf] %v630
          %647 = vst [vmem:[%s348 + $0x14] sm:$0xf] %v631
          %648 = vst [vmem:[%s348 + $0x18] sm:$0xf] %v632
          %649 = vst [vmem:[%s348 + $0x1c] sm:$0xf] %v633
          %650 = vst [vmem:[%s348 + $0x20] sm:$0xf] %v634
          %651 = vst [vmem:[%s348 + $0x24] sm:$0xf] %v635
          %652 = vst [vmem:[%s348 + $0x28] sm:$0xf] %v636
          %653 = vst [vmem:[%s348 + $0x2c] sm:$0xf] %v637
          %654 = vst [vmem:[%s348 + $0x30] sm:$0xf] %v638
          %655 = vst [vmem:[%s348 + $0x34] sm:$0xf] %v639
          %656 = vst [vmem:[%s348 + $0x38] sm:$0xf] %v640
          %657 = vst [vmem:[%s348 + $0x3c] sm:$0xf] %v641
          %v658 = vld [vmem:[%s354] sm:$0xff]
          %v659 = vld [vmem:[%s354 + $0x8] sm:$0xff]
          %v660 = vld [vmem:[%s354 + $0x10] sm:$0xff]
          %v661 = vld [vmem:[%s354 + $0x18] sm:$0xff]
          %v662 = vld [vmem:[%s354 + $0x20] sm:$0xff]
          %v663 = vld [vmem:[%s354 + $0x28] sm:$0xff]
          %v664 = vld [vmem:[%s354 + $0x30] sm:$0xff]
          %v665 = vld [vmem:[%s354 + $0x38] sm:$0xff]
          %v666 = vld [vmem:[%s354 + $0x40] sm:$0xff]
          %v667 = vld [vmem:[%s354 + $0x48] sm:$0xff]
          %v668 = vld [vmem:[%s354 + $0x50] sm:$0xff]
          %v669 = vld [vmem:[%s354 + $0x58] sm:$0xff]
          %v670 = vld [vmem:[%s354 + $0x60] sm:$0xff]
          %v671 = vld [vmem:[%s354 + $0x68] sm:$0xff]
          %v672 = vld [vmem:[%s354 + $0x70] sm:$0xff]
          %v673 = vld [vmem:[%s354 + $0x78] sm:$0xff]
          %v674 = vld [vmem:[%s342] sm:$0xff]
          %v675 = vld [vmem:[%s342 + $0x8] sm:$0xff]
          %v676 = vld [vmem:[%s342 + $0x10] sm:$0xff]
          %v677 = vld [vmem:[%s342 + $0x18] sm:$0xff]
          %v678 = vld [vmem:[%s342 + $0x20] sm:$0xff]
          %v679 = vld [vmem:[%s342 + $0x28] sm:$0xff]
          %v680 = vld [vmem:[%s342 + $0x30] sm:$0xff]
          %v681 = vld [vmem:[%s342 + $0x38] sm:$0xff]
          %v682 = vld [vmem:[%s342 + $0x40] sm:$0xff]
          %v683 = vld [vmem:[%s342 + $0x48] sm:$0xff]
          %v684 = vld [vmem:[%s342 + $0x50] sm:$0xff]
          %v685 = vld [vmem:[%s342 + $0x58] sm:$0xff]
          %v686 = vld [vmem:[%s342 + $0x60] sm:$0xff]
          %v687 = vld [vmem:[%s342 + $0x68] sm:$0xff]
          %v688 = vld [vmem:[%s342 + $0x70] sm:$0xff]
          %v689 = vld [vmem:[%s342 + $0x78] sm:$0xff]
          %v690 = vadd.f32 %v658, %v674
          %v691 = vadd.f32 %v659, %v675
          %v692 = vadd.f32 %v660, %v676
          %v693 = vadd.f32 %v661, %v677
          %v694 = vadd.f32 %v662, %v678
          %v695 = vadd.f32 %v663, %v679
          %v696 = vadd.f32 %v664, %v680
          %v697 = vadd.f32 %v665, %v681
          %v698 = vadd.f32 %v666, %v682
          %v699 = vadd.f32 %v667, %v683
          %v700 = vadd.f32 %v668, %v684
          %v701 = vadd.f32 %v669, %v685
          %v702 = vadd.f32 %v670, %v686
          %v703 = vadd.f32 %v671, %v687
          %v704 = vadd.f32 %v672, %v688
          %v705 = vadd.f32 %v673, %v689
          %706 = vst [vmem:[%s354] sm:$0xff] %v690
          %707 = vst [vmem:[%s354 + $0x8] sm:$0xff] %v691
          %708 = vst [vmem:[%s354 + $0x10] sm:$0xff] %v692
          %709 = vst [vmem:[%s354 + $0x18] sm:$0xff] %v693
          %710 = vst [vmem:[%s354 + $0x20] sm:$0xff] %v694
          %711 = vst [vmem:[%s354 + $0x28] sm:$0xff] %v695
          %712 = vst [vmem:[%s354 + $0x30] sm:$0xff] %v696
          %713 = vst [vmem:[%s354 + $0x38] sm:$0xff] %v697
          %714 = vst [vmem:[%s354 + $0x40] sm:$0xff] %v698
          %715 = vst [vmem:[%s354 + $0x48] sm:$0xff] %v699
          %716 = vst [vmem:[%s354 + $0x50] sm:$0xff] %v700
          %717 = vst [vmem:[%s354 + $0x58] sm:$0xff] %v701
          %718 = vst [vmem:[%s354 + $0x60] sm:$0xff] %v702
          %719 = vst [vmem:[%s354 + $0x68] sm:$0xff] %v703
          %720 = vst [vmem:[%s354 + $0x70] sm:$0xff] %v704
          %721 = vst [vmem:[%s354 + $0x78] sm:$0xff] %v705
        $region81: #{lightgcn_forward.7} parent=68 // pred_fallthru
          _
        %s722 = smul.u32 16, %s20
        %p723 = scmp.lt.s32.totalorder %s722, 31
        %s724 = scalar_select %p723, %s722, 31
        %s725 = smul.addr %s724, 4
        %s726 = scalar_lea.vmem %s3, %s725
        %s727 = smul.u32 16, %s20
        %p728 = scmp.lt.s32.totalorder %s727, 31
        %s729 = scalar_select %p728, %s727, 31
        %s730 = smul.addr %s729, 8
        %s731 = scalar_lea.vmem %s4, %s730
        // Predicated region
        $region82: #{lightgcn_forward.7} parent=68 // pred_check
          %p732 = pneg %p121
        $region83: #{lightgcn_forward.7} parent=68 // pred_check_branch
          %734 = sbr.rel (%p732) target = $region85
        $region84: #{lightgcn_forward.7} parent=68 // pred_region
          %s735 = smul.u32 16, %s20
        $region85: #{lightgcn_forward.7} parent=68 // pred_fallthru
          _
        // Predicated region
        $region86: #{lightgcn_forward.7} parent=68 // pred_check
          %p736 = pneg %p147
        $region87: #{lightgcn_forward.7} parent=68 // pred_check_branch
          %738 = sbr.rel (%p736) target = $region89
        $region88: #{lightgcn_forward.7} parent=68 // pred_region
          %s739 = smul.u32 16, %s20
        $region89: #{lightgcn_forward.7} parent=68 // pred_fallthru
          _
      $region69: #{lightgcn_forward.7} parent=5 // pred_fallthru
        _
      %p740 = scmp.le.s32.totalorder 2, %s11
      // Predicated region
      $region90: #{lightgcn_forward.7} parent=5 // pred_check
        %p741 = pneg %p740
      $region91: #{lightgcn_forward.7} parent=5 // pred_check_branch
        %743 = sbr.rel (%p741) target = $region93
      $region92: #{lightgcn_forward.7} parent=5 // pred_region
        %s744 = ssub.s32 %s11, 2
        // Predicated region
        $region94: #{lightgcn_forward.7} parent=92 // pred_check
          %p745 = pneg %p127
        $region95: #{lightgcn_forward.7} parent=92 // pred_check_branch
          %747 = sbr.rel (%p745) target = $region97
        $region96: #{lightgcn_forward.7} parent=92 // pred_region
          %s748 = smul.u32 16, %s22
          %p749 = scmp.lt.s32.totalorder %s748, 31
          %s750 = scalar_select %p749, %s748, 31
          %s751 = smul.addr %s750, 4
          %s752 = scalar_lea.vmem %s3, %s751
        $region97: #{lightgcn_forward.7} parent=92 // pred_fallthru
          _
        // Predicated region
        $region98: #{lightgcn_forward.7} parent=92 // pred_check
          %p753 = pneg %p153
        $region99: #{lightgcn_forward.7} parent=92 // pred_check_branch
          %755 = sbr.rel (%p753) target = $region101
        $region100: #{lightgcn_forward.7} parent=92 // pred_region
          %s756 = smul.u32 16, %s22
          %p757 = scmp.lt.s32.totalorder %s756, 31
          %s758 = scalar_select %p757, %s756, 31
          %s759 = smul.addr %s758, 8
          %s760 = scalar_lea.vmem %s4, %s759
        $region101: #{lightgcn_forward.7} parent=92 // pred_fallthru
          _
      $region93: #{lightgcn_forward.7} parent=5 // pred_fallthru
        _
    $region6: #{lightgcn_forward.7} parent=1 // loop_footer
      %s15 = sadd.s32 1, %s11
    $region7: #{lightgcn_forward.7} parent=1 // loop_footer_branch
      %10 = sbr.rel target = $region3
    $region8: #{lightgcn_forward.7} parent=1 // loop_exit
      _

// kernel: lightgcn_forward.10
$region0: #{lightgcn_forward.10}
  #allocation0 [shape = 'u32[]', space=smem, size = 0x4, offset = 0x4, fixed_abs, tag = 'smem constant byte address 0x4 - core index']
  #allocation1 [shape = 'u32[72,128]{1,0:T(1,128)}', space=vmem, size = 0x9000, scoped, tag = 'internal scratch']
  %s0 = inlined_call_operand.vmem [shape: bf16[256,256], index: 0, kind: input, shape index: {}]
  %s1 = inlined_call_operand.vmem [shape: bf16[256,128], index: 1, kind: input, shape index: {}]
  %s2 = inlined_call_operand.vmem [shape: f32[256,128], index: 2, kind: input, shape index: {}, may-alias: {2,4}]
  %s3 = inlined_call_operand.hbm [shape: bf16[256,128], index: 3, kind: output, shape index: {0}]
  %s4 = inlined_call_operand.vmem [shape: f32[256,128], index: 4, kind: output, shape index: {1}, may-alias: {2,4}]
  %5 = xla_tuple %s3, %s4
  %s6 = sld [smem:[#allocation0]]
  $region102: #{lightgcn_forward.10} parent=0
    _
  %s8 = ssub.s32 1, %s6
  %s9 = scalar_select 0, %s8, %s6
  $region1: #{lightgcn_forward.10} parent=0
    #allocation2 [shape = 'u8[65536]{0}', space=vmem, size = 0x10000, scoped, tag = 'input window, operand 0']
    #allocation3 [shape = 'u8[65536]{0}', space=vmem, size = 0x10000, scoped, tag = 'output window, operand 0']
    #allocation4 [shape = 's32[2]{0}', space=sflag, size = 0x8, scoped, tag = 'scoped memory for lightgcn_forward.10']
    %10 = vsyncpa [#allocation4], 0
    %s11 = scalar_lea.sflag [#allocation4], 1
    %12 = vsyncpa %s11, 0
    loop: start=0, step=1, limit=6
    $region2: #{lightgcn_forward.10} parent=1 // loop_pre_header
      _
    $region3: #{lightgcn_forward.10} parent=1 // loop_header
      %s14 = sphi 0, %s18
      %p15 = scmp.ge.s32.totalorder %s14, 6
      %s21 = sphi 0, %s33
      %s22 = sphi 0, %s29
      %s23 = sphi 0, %s21
      %s24 = sphi 0, %s22
      %s25 = sphi 0, %s23
      %s26 = sphi 0, %s24
      %s38 = sphi 0, %s40
      %s41 = sphi 0, %s38
      %s42 = sphi 0, %s41
      %s58 = sphi 0, %s42
      %s62 = sphi 0, %s62
      %s64 = sphi 0, %s62
      %s65 = sphi 0, %s64
      %s79 = sphi 0, %s65
      %s85 = sphi 0, %s87
      %s88 = sphi 0, %s85
      %s89 = sphi 0, %s88
      %s105 = sphi 0, %s89
      %s111 = sphi 0, %s113
      %s114 = sphi 0, %s111
      %s115 = sphi 0, %s114
      %s131 = sphi 0, %s115
      %s137 = sphi 0, %s139
      %s140 = sphi 0, %s137
      %s141 = sphi 0, %s140
      %s157 = sphi 0, %s141
    $region4: #{lightgcn_forward.10} parent=1 // loop_header_branch
      %17 = sbr.rel (%p15) target = $region8
    $region5: #{lightgcn_forward.10} parent=1 // loop_body
      %s19 = ssub.s32 %s14, 1
      %s20 = ssub.s32 %s14, 2
      %s27 = sadd.s32 1, %s22
      %p28 = scmp.ge.s32.totalorder %s27, 2
      %s29 = scalar_select %p28, 0, %s27
      %s30 = sadd.s32 1, %s21
      %s31 = scalar_select %p28, %s30, %s21
      %p32 = scmp.ge.s32.totalorder %s31, 2
      %s33 = scalar_select %p32, 0, %s31
      %s34 = ssub.s32 %s21, %s33
      %s35 = ssub.s32 %s22, %s29
      %s36 = sor.u32 %s34, %s35
      %p37 = scmp.eq.s32.totalorder %s36, 0
      %s39 = sadd.s32 %s38, 1
      %s40 = scalar_select %p37, %s38, %s39
      %p43 = pneg %p37
      %p44 = scmp.eq.s32.totalorder %s14, 3
      %p45 = por %p43, %p44
      %p46 = scmp.ne.s32.totalorder %s38, %s41
      %p47 = scmp.eq.s32.totalorder %s14, 0
      %p48 = por %p46, %p47
      %p49 = scmp.ne.s32.totalorder %s38, %s41
      %p50 = scmp.eq.s32.totalorder %s19, 3
      %p51 = por %p49, %p50
      %p52 = scmp.ne.s32.totalorder %s41, %s42
      %p53 = scmp.eq.s32.totalorder %s19, 0
      %p54 = por %p52, %p53
      %p55 = scmp.ne.s32.totalorder %s41, %s42
      %p56 = scmp.eq.s32.totalorder %s20, 3
      %p57 = por %p55, %p56
      %p59 = scmp.ne.s32.totalorder %s42, %s58
      %p60 = scmp.eq.s32.totalorder %s20, 0
      %p61 = por %p59, %p60
      %s63 = sadd.s32 %s62, 1
      %p66 = scmp.eq.s32.totalorder %s14, 3
      %p67 = scmp.ne.s32.totalorder %s62, %s64
      %p68 = scmp.eq.s32.totalorder %s14, 0
      %p69 = por %p67, %p68
      %p70 = scmp.ne.s32.totalorder %s62, %s64
      %p71 = scmp.eq.s32.totalorder %s19, 3
      %p72 = por %p70, %p71
      %p73 = scmp.ne.s32.totalorder %s64, %s65
      %p74 = scmp.eq.s32.totalorder %s19, 0
      %p75 = por %p73, %p74
      %p76 = scmp.ne.s32.totalorder %s64, %s65
      %p77 = scmp.eq.s32.totalorder %s20, 3
      %p78 = por %p76, %p77
      %p80 = scmp.ne.s32.totalorder %s65, %s79
      %p81 = scmp.eq.s32.totalorder %s20, 0
      %p82 = por %p80, %p81
      %s83 = ssub.s32 %s21, %s33
      %p84 = scmp.eq.s32.totalorder %s83, 0
      %s86 = sadd.s32 %s85, 1
      %s87 = scalar_select %p84, %s85, %s86
      %p90 = pneg %p84
      %p91 = scmp.eq.s32.totalorder %s14, 3
      %p92 = por %p90, %p91
      %p93 = scmp.ne.s32.totalorder %s85, %s88
      %p94 = scmp.eq.s32.totalorder %s14, 0
      %p95 = por %p93, %p94
      %p96 = scmp.ne.s32.totalorder %s85, %s88
      %p97 = scmp.eq.s32.totalorder %s19, 3
      %p98 = por %p96, %p97
      %p99 = scmp.ne.s32.totalorder %s88, %s89
      %p100 = scmp.eq.s32.totalorder %s19, 0
      %p101 = por %p99, %p100
      %p102 = scmp.ne.s32.totalorder %s88, %s89
      %p103 = scmp.eq.s32.totalorder %s20, 3
      %p104 = por %p102, %p103
      %p106 = scmp.ne.s32.totalorder %s89, %s105
      %p107 = scmp.eq.s32.totalorder %s20, 0
      %p108 = por %p106, %p107
      %s109 = ssub.s32 %s21, %s33
      %p110 = scmp.eq.s32.totalorder %s109, 0
      %s112 = sadd.s32 %s111, 1
      %s113 = scalar_select %p110, %s111, %s112
      %p116 = pneg %p110
      %p117 = scmp.eq.s32.totalorder %s14, 3
      %p118 = por %p116, %p117
      %p119 = scmp.ne.s32.totalorder %s111, %s114
      %p120 = scmp.eq.s32.totalorder %s14, 0
      %p121 = por %p119, %p120
      %p122 = scmp.ne.s32.totalorder %s111, %s114
      %p123 = scmp.eq.s32.totalorder %s19, 3
      %p124 = por %p122, %p123
      %p125 = scmp.ne.s32.totalorder %s114, %s115
      %p126 = scmp.eq.s32.totalorder %s19, 0
      %p127 = por %p125, %p126
      %p128 = scmp.ne.s32.totalorder %s114, %s115
      %p129 = scmp.eq.s32.totalorder %s20, 3
      %p130 = por %p128, %p129
      %p132 = scmp.ne.s32.totalorder %s115, %s131
      %p133 = scmp.eq.s32.totalorder %s20, 0
      %p134 = por %p132, %p133
      %s135 = ssub.s32 %s21, %s33
      %p136 = scmp.eq.s32.totalorder %s135, 0
      %s138 = sadd.s32 %s137, 1
      %s139 = scalar_select %p136, %s137, %s138
      %p142 = pneg %p136
      %p143 = scmp.eq.s32.totalorder %s14, 3
      %p144 = por %p142, %p143
      %p145 = scmp.ne.s32.totalorder %s137, %s140
      %p146 = scmp.eq.s32.totalorder %s14, 0
      %p147 = por %p145, %p146
      %p148 = scmp.ne.s32.totalorder %s137, %s140
      %p149 = scmp.eq.s32.totalorder %s19, 3
      %p150 = por %p148, %p149
      %p151 = scmp.ne.s32.totalorder %s140, %s141
      %p152 = scmp.eq.s32.totalorder %s19, 0
      %p153 = por %p151, %p152
      %p154 = scmp.ne.s32.totalorder %s140, %s141
      %p155 = scmp.eq.s32.totalorder %s20, 3
      %p156 = por %p154, %p155
      %p158 = scmp.ne.s32.totalorder %s141, %s157
      %p159 = scmp.eq.s32.totalorder %s20, 0
      %p160 = por %p158, %p159
      %p161 = scmp.le.s32.totalorder 1, %s14
      %p162 = scmp.lt.s32.totalorder %s14, 5
      %p163 = pnand %p161, %p162
      %p164 = pneg %p163
      // Predicated region
      $region9: #{lightgcn_forward.10} parent=5 // pred_check
        _
      $region10: #{lightgcn_forward.10} parent=5 // pred_check_branch
        %166 = sbr.rel (%p163) target = $region12
      $region11: #{lightgcn_forward.10} parent=5 // pred_region
        %s167 = ssub.s32 %s14, 1
        // Predicated region
        $region13: #{lightgcn_forward.10} parent=11 // pred_check
          %p168 = pneg %p75
        $region14: #{lightgcn_forward.10} parent=11 // pred_check_branch
          %170 = sbr.rel (%p168) target = $region16
        $region15: #{lightgcn_forward.10} parent=11 // pred_region
          _
        $region16: #{lightgcn_forward.10} parent=11 // pred_fallthru
          _
      $region12: #{lightgcn_forward.10} parent=5 // pred_fallthru
        _
      %p171 = scmp.lt.s32.totalorder %s14, 4
      // Predicated region
      $region17: #{lightgcn_forward.10} parent=5 // pred_check
        %p172 = pneg %p171
      $region18: #{lightgcn_forward.10} parent=5 // pred_check_branch
        %174 = sbr.rel (%p172) target = $region20
      $region19: #{lightgcn_forward.10} parent=5 // pred_region
        // Predicated region
        $region21: #{lightgcn_forward.10} parent=19 // pred_check
          %p175 = pneg %p48
        $region22: #{lightgcn_forward.10} parent=19 // pred_check_branch
          %177 = sbr.rel (%p175) target = $region24
        $region23: #{lightgcn_forward.10} parent=19 // pred_region
          %s178 = sand.u32 %s38, 1
          %s179 = sand.u32 %s38, 1
          %s180 = smul.addr %s179, 64
          %s181 = scalar_lea.vmem [#allocation2], %s180
          %s182 = smul.u32 16, %s21
          %s183 = smul.addr %s182, 2
          %s184 = sadd.s32 %s22, %s183
          %s185 = smul.addr %s184, 4
          %s186 = scalar_lea.vmem %s0, %s185
          // Predicated region
          $region25: #{lightgcn_forward.10} parent=23 // pred_check
            _
          $region26: #{lightgcn_forward.10} parent=23 // pred_check_branch
            %188 = sbr.rel (0) target = $region28
          $region27: #{lightgcn_forward.10} parent=23 // pred_region
            // Predicated region
            $region29: #{lightgcn_forward.10} parent=27 // pred_check
              _
            $region30: #{lightgcn_forward.10} parent=27 // pred_check_branch
              %190 = sbr.rel target = $region32
            $region31: #{lightgcn_forward.10} parent=27 // pred_region
              // Predicated region
              $region44: #{lightgcn_forward.10} parent=31 // pred_check
                _
              $region45: #{lightgcn_forward.10} parent=31 // pred_check_branch
                %236 = sbr.rel (0) target = $region47
              $region46: #{lightgcn_forward.10} parent=31 // pred_region
                loop: start=0, step=1, limit=1
                $region48: #{lightgcn_forward.10} parent=46 // loop_pre_header
                  _
                $region49: #{lightgcn_forward.10} parent=46 // loop_header
                  %s238 = sphi 0, %s242
                  %p239 = scmp.ge.s32.totalorder %s238, 1
                  %s243 = sphi %s186, %s186
                  %s244 = sphi %s181, %s181
                $region50: #{lightgcn_forward.10} parent=46 // loop_header_branch
                  %241 = sbr.rel (%p239) target = $region54
                $region51: #{lightgcn_forward.10} parent=46 // loop_body
                  _
                $region52: #{lightgcn_forward.10} parent=46 // loop_footer
                  %s242 = sadd.s32 1, %s238
                $region53: #{lightgcn_forward.10} parent=46 // loop_footer_branch
                  %237 = sbr.rel target = $region49
                $region54: #{lightgcn_forward.10} parent=46 // loop_exit
                  _
                %s246 = ssub.s32 16, 1
                loop: start=0, step=1, limit=1
                $region55: #{lightgcn_forward.10} parent=46 // loop_pre_header
                  _
                $region56: #{lightgcn_forward.10} parent=46 // loop_header
                  %s248 = sphi 0, %s252
                  %p249 = scmp.ge.s32.totalorder %s248, 1
                  %s253 = sphi %s186, %s186
                  %s254 = sphi %s181, %s181
                $region57: #{lightgcn_forward.10} parent=46 // loop_header_branch
                  %251 = sbr.rel (%p249) target = $region61
                $region58: #{lightgcn_forward.10} parent=46 // loop_body
                  %v255 = vld [vmem:[%s253] sm:%s246]
                  %256 = vst [vmem:[%s254] sm:%s246] %v255
                  %v257 = vld [vmem:[%s253 + $0x8] sm:%s246]
                  %258 = vst [vmem:[%s254 + $0x4] sm:%s246] %v257
                  %v259 = vld [vmem:[%s253 + $0x10] sm:%s246]
                  %260 = vst [vmem:[%s254 + $0x8] sm:%s246] %v259
                  %v261 = vld [vmem:[%s253 + $0x18] sm:%s246]
                  %262 = vst [vmem:[%s254 + $0xc] sm:%s246] %v261
                  %v263 = vld [vmem:[%s253 + $0x20] sm:%s246]
                  %264 = vst [vmem:[%s254 + $0x10] sm:%s246] %v263
                  %v265 = vld [vmem:[%s253 + $0x28] sm:%s246]
                  %266 = vst [vmem:[%s254 + $0x14] sm:%s246] %v265
                  %v267 = vld [vmem:[%s253 + $0x30] sm:%s246]
                  %268 = vst [vmem:[%s254 + $0x18] sm:%s246] %v267
                  %v269 = vld [vmem:[%s253 + $0x38] sm:%s246]
                  %270 = vst [vmem:[%s254 + $0x1c] sm:%s246] %v269
                  %v271 = vld [vmem:[%s253 + $0x40] sm:%s246]
                  %272 = vst [vmem:[%s254 + $0x20] sm:%s246] %v271
                  %v273 = vld [vmem:[%s253 + $0x48] sm:%s246]
                  %274 = vst [vmem:[%s254 + $0x24] sm:%s246] %v273
                  %v275 = vld [vmem:[%s253 + $0x50] sm:%s246]
                  %276 = vst [vmem:[%s254 + $0x28] sm:%s246] %v275
                  %v277 = vld [vmem:[%s253 + $0x58] sm:%s246]
                  %278 = vst [vmem:[%s254 + $0x2c] sm:%s246] %v277
                  %v279 = vld [vmem:[%s253 + $0x60] sm:%s246]
                  %280 = vst [vmem:[%s254 + $0x30] sm:%s246] %v279
                  %v281 = vld [vmem:[%s253 + $0x68] sm:%s246]
                  %282 = vst [vmem:[%s254 + $0x34] sm:%s246] %v281
                  %v283 = vld [vmem:[%s253 + $0x70] sm:%s246]
                  %284 = vst [vmem:[%s254 + $0x38] sm:%s246] %v283
                  %v285 = vld [vmem:[%s253 + $0x78] sm:%s246]
                  %286 = vst [vmem:[%s254 + $0x3c] sm:%s246] %v285
                $region59: #{lightgcn_forward.10} parent=46 // loop_footer
                  %s252 = sadd.s32 1, %s248
                $region60: #{lightgcn_forward.10} parent=46 // loop_footer_branch
                  %247 = sbr.rel target = $region56
                $region61: #{lightgcn_forward.10} parent=46 // loop_exit
                  _
              $region47: #{lightgcn_forward.10} parent=31 // pred_fallthru
                _
            $region32: #{lightgcn_forward.10} parent=27 // pred_fallthru
              _
            // Predicated region
            $region33: #{lightgcn_forward.10} parent=27 // pred_check
              _
            $region34: #{lightgcn_forward.10} parent=27 // pred_check_branch
              %192 = sbr.rel (0) target = $region36
            $region35: #{lightgcn_forward.10} parent=27 // pred_region
              %s194 = ssub.s32 16, 1
              loop: start=0, step=1, limit=1
              $region37: #{lightgcn_forward.10} parent=35 // loop_pre_header
                _
              $region38: #{lightgcn_forward.10} parent=35 // loop_header
                %s196 = sphi 0, %s200
                %p197 = scmp.ge.s32.totalorder %s196, 1
                %s201 = sphi %s186, %s186
                %s202 = sphi %s181, %s181
              $region39: #{lightgcn_forward.10} parent=35 // loop_header_branch
                %199 = sbr.rel (%p197) target = $region43
              $region40: #{lightgcn_forward.10} parent=35 // loop_body
                %v203 = vld [vmem:[%s201] sm:%s194]
                %204 = vst [vmem:[%s202] sm:%s194] %v203
                %v205 = vld [vmem:[%s201 + $0x8] sm:%s194]
                %206 = vst [vmem:[%s202 + $0x4] sm:%s194] %v205
                %v207 = vld [vmem:[%s201 + $0x10] sm:%s194]
                %208 = vst [vmem:[%s202 + $0x8] sm:%s194] %v207
                %v209 = vld [vmem:[%s201 + $0x18] sm:%s194]
                %210 = vst [vmem:[%s202 + $0xc] sm:%s194] %v209
                %v211 = vld [vmem:[%s201 + $0x20] sm:%s194]
                %212 = vst [vmem:[%s202 + $0x10] sm:%s194] %v211
                %v213 = vld [vmem:[%s201 + $0x28] sm:%s194]
                %214 = vst [vmem:[%s202 + $0x14] sm:%s194] %v213
                %v215 = vld [vmem:[%s201 + $0x30] sm:%s194]
                %216 = vst [vmem:[%s202 + $0x18] sm:%s194] %v215
                %v217 = vld [vmem:[%s201 + $0x38] sm:%s194]
                %218 = vst [vmem:[%s202 + $0x1c] sm:%s194] %v217
                %v219 = vld [vmem:[%s201 + $0x40] sm:%s194]
                %220 = vst [vmem:[%s202 + $0x20] sm:%s194] %v219
                %v221 = vld [vmem:[%s201 + $0x48] sm:%s194]
                %222 = vst [vmem:[%s202 + $0x24] sm:%s194] %v221
                %v223 = vld [vmem:[%s201 + $0x50] sm:%s194]
                %224 = vst [vmem:[%s202 + $0x28] sm:%s194] %v223
                %v225 = vld [vmem:[%s201 + $0x58] sm:%s194]
                %226 = vst [vmem:[%s202 + $0x2c] sm:%s194] %v225
                %v227 = vld [vmem:[%s201 + $0x60] sm:%s194]
                %228 = vst [vmem:[%s202 + $0x30] sm:%s194] %v227
                %v229 = vld [vmem:[%s201 + $0x68] sm:%s194]
                %230 = vst [vmem:[%s202 + $0x34] sm:%s194] %v229
                %v231 = vld [vmem:[%s201 + $0x70] sm:%s194]
                %232 = vst [vmem:[%s202 + $0x38] sm:%s194] %v231
                %v233 = vld [vmem:[%s201 + $0x78] sm:%s194]
                %234 = vst [vmem:[%s202 + $0x3c] sm:%s194] %v233
              $region41: #{lightgcn_forward.10} parent=35 // loop_footer
                %s200 = sadd.s32 1, %s196
              $region42: #{lightgcn_forward.10} parent=35 // loop_footer_branch
                %195 = sbr.rel target = $region38
              $region43: #{lightgcn_forward.10} parent=35 // loop_exit
                _
            $region36: #{lightgcn_forward.10} parent=27 // pred_fallthru
              _
          $region28: #{lightgcn_forward.10} parent=23 // pred_fallthru
            _
          %287 = vnop
        $region24: #{lightgcn_forward.10} parent=19 // pred_fallthru
          _
        // Predicated region
        $region62: #{lightgcn_forward.10} parent=19 // pred_check
          %p288 = pneg %p95
        $region63: #{lightgcn_forward.10} parent=19 // pred_check_branch
          %290 = sbr.rel (%p288) target = $region65
        $region64: #{lightgcn_forward.10} parent=19 // pred_region
          %s291 = smul.u32 16, %s21
          %p292 = scmp.lt.s32.totalorder %s291, 31
          %s293 = scalar_select %p292, %s291, 31
          %s294 = smul.addr %s293, 8
          %s295 = scalar_lea.vmem %s2, %s294
          %s296 = smul.u32 16, %s21
        $region65: #{lightgcn_forward.10} parent=19 // pred_fallthru
          _
      $region20: #{lightgcn_forward.10} parent=5 // pred_fallthru
        _
      %p297 = scmp.le.s32.totalorder 1, %s14
      %p298 = scmp.lt.s32.totalorder %s14, 5
      %p299 = pnand %p297, %p298
      %p300 = pneg %p299
      // Predicated region
      $region66: #{lightgcn_forward.10} parent=5 // pred_check
        _
      $region67: #{lightgcn_forward.10} parent=5 // pred_check_branch
        %302 = sbr.rel (%p299) target = $region69
      $region68: #{lightgcn_forward.10} parent=5 // pred_region
        %s303 = ssub.s32 %s14, 1
        %s304 = sand.u32 %s41, 1
        %s305 = sand.u32 %s41, 1
        %s306 = smul.addr %s305, 64
        %s307 = scalar_lea.vmem [#allocation2], %s306
        // Predicated region
        $region70: #{lightgcn_forward.10} parent=68 // pred_check
          %p308 = pneg %p54
        $region71: #{lightgcn_forward.10} parent=68 // pred_check_branch
          %310 = sbr.rel (%p308) target = $region73
        $region72: #{lightgcn_forward.10} parent=68 // pred_region
          _
        $region73: #{lightgcn_forward.10} parent=68 // pred_fallthru
          _
        %s311 = sand.u32 %s41, 1
        %s312 = sand.u32 %s41, 1
        %s313 = smul.addr %s312, 64
        %s314 = scalar_lea.vmem [#allocation2], %s313
        %p315 = pneg %p54
        %p316 = pneg %p51
        %p317 = pneg %p75
        %p318 = pneg %p72
        %s319 = smul.u32 16, %s23
        %p320 = scmp.lt.s32.totalorder %s319, 31
        %s321 = scalar_select %p320, %s319, 31
        %s322 = smul.addr %s321, 8
        %s323 = scalar_lea.vmem %s2, %s322
        %p324 = pneg %p101
        %p325 = pneg %p98
        %p326 = pneg %p127
        %p327 = pneg %p124
        %s328 = sand.u32 %s114, 1
        %s329 = scalar_lea.sflag [#allocation4], %s328
        %s330 = sand.u32 %s114, 1
        %s331 = smul.addr %s330, 64
        %s332 = scalar_lea.vmem [#allocation3], %s331
        %p333 = pneg %p153
        %p334 = pneg %p150
        %s335 = smul.u32 16, %s23
        %p336 = scmp.lt.s32.totalorder %s335, 31
        %s337 = scalar_select %p336, %s335, 31
        %s338 = smul.addr %s337, 8
        %s339 = scalar_lea.vmem %s4, %s338
        %s340 = smul.u32 16, %s23
        %s341 = smul.u32 16, %s23
        %p342 = scmp.lt.s32.totalorder %s341, 31
        %s343 = scalar_select %p342, %s341, 31
        %s344 = smul.addr %s343, 8
        %s345 = scalar_lea.vmem %s2, %s344
        %s346 = smul.u32 16, %s23
        %s347 = smul.u32 16, %s23
        %s348 = smul.u32 16, %s23
        %p349 = scmp.lt.s32.totalorder %s348, 31
        %s350 = scalar_select %p349, %s348, 31
        %s351 = smul.addr %s350, 8
        %s352 = scalar_lea.vmem %s4, %s351
        %s353 = smul.u32 16, %s23
        %p354 = scmp.eq.s32.totalorder %s24, 0
        // Predicated region
        $region74: #{lightgcn_forward.10} parent=68 // pred_check
          %p355 = pneg %p354
        $region75: #{lightgcn_forward.10} parent=68 // pred_check_branch
          %357 = sbr.rel (%p355) target = $region77
        $region76: #{lightgcn_forward.10} parent=68 // pred_region
          %358 = vst [vmem:[%s352] sm:$0xff] 0.0
          %359 = vst [vmem:[%s352 + $0x8] sm:$0xff] 0.0
          %360 = vst [vmem:[%s352 + $0x10] sm:$0xff] 0.0
          %361 = vst [vmem:[%s352 + $0x18] sm:$0xff] 0.0
          %362 = vst [vmem:[%s352 + $0x20] sm:$0xff] 0.0
          %363 = vst [vmem:[%s352 + $0x28] sm:$0xff] 0.0
          %364 = vst [vmem:[%s352 + $0x30] sm:$0xff] 0.0
          %365 = vst [vmem:[%s352 + $0x38] sm:$0xff] 0.0
          %366 = vst [vmem:[%s352 + $0x40] sm:$0xff] 0.0
          %367 = vst [vmem:[%s352 + $0x48] sm:$0xff] 0.0
          %368 = vst [vmem:[%s352 + $0x50] sm:$0xff] 0.0
          %369 = vst [vmem:[%s352 + $0x58] sm:$0xff] 0.0
          %370 = vst [vmem:[%s352 + $0x60] sm:$0xff] 0.0
          %371 = vst [vmem:[%s352 + $0x68] sm:$0xff] 0.0
          %372 = vst [vmem:[%s352 + $0x70] sm:$0xff] 0.0
          %373 = vst [vmem:[%s352 + $0x78] sm:$0xff] 0.0
        $region77: #{lightgcn_forward.10} parent=68 // pred_fallthru
          _
        %s374 = smul.u32 %s24, 128
        %s375 = sshra.s32 %s374, 3
        %s376 = sand.u32 %s374, 7
        %s377 = smul.addr %s375, 4
        %s378 = scalar_lea.vmem %s1, %s377
        %v379 = vld [vmem:[%s378] sm:$0xf]
        %v380 = vld [vmem:[%s378 + $0x4] sm:$0xf]
        %v381 = vld [vmem:[%s378 + $0x8] sm:$0xf]
        %v382 = vld [vmem:[%s378 + $0xc] sm:$0xf]
        %v383 = vld [vmem:[%s378 + $0x10] sm:$0xf]
        %v384 = vld [vmem:[%s378 + $0x14] sm:$0xf]
        %v385 = vld [vmem:[%s378 + $0x18] sm:$0xf]
        %v386 = vld [vmem:[%s378 + $0x1c] sm:$0xf]
        %v387 = vld [vmem:[%s378 + $0x20] sm:$0xf]
        %v388 = vld [vmem:[%s378 + $0x24] sm:$0xf]
        %v389 = vld [vmem:[%s378 + $0x28] sm:$0xf]
        %v390 = vld [vmem:[%s378 + $0x2c] sm:$0xf]
        %v391 = vld [vmem:[%s378 + $0x30] sm:$0xf]
        %v392 = vld [vmem:[%s378 + $0x34] sm:$0xf]
        %v393 = vld [vmem:[%s378 + $0x38] sm:$0xf]
        %v394 = vld [vmem:[%s378 + $0x3c] sm:$0xf]
        %v395 = vld [vmem:[%s352] sm:$0xff]
        %v396 = vld [vmem:[%s352 + $0x8] sm:$0xff]
        %v397 = vld [vmem:[%s352 + $0x10] sm:$0xff]
        %v398 = vld [vmem:[%s352 + $0x18] sm:$0xff]
        %v399 = vld [vmem:[%s352 + $0x20] sm:$0xff]
        %v400 = vld [vmem:[%s352 + $0x28] sm:$0xff]
        %v401 = vld [vmem:[%s352 + $0x30] sm:$0xff]
        %v402 = vld [vmem:[%s352 + $0x38] sm:$0xff]
        %v403 = vld [vmem:[%s352 + $0x40] sm:$0xff]
        %v404 = vld [vmem:[%s352 + $0x48] sm:$0xff]
        %v405 = vld [vmem:[%s352 + $0x50] sm:$0xff]
        %v406 = vld [vmem:[%s352 + $0x58] sm:$0xff]
        %v407 = vld [vmem:[%s352 + $0x60] sm:$0xff]
        %v408 = vld [vmem:[%s352 + $0x68] sm:$0xff]
        %v409 = vld [vmem:[%s352 + $0x70] sm:$0xff]
        %v410 = vld [vmem:[%s352 + $0x78] sm:$0xff]
        %v411 = vld [vmem:[%s307] sm:$0xf]
        %v412 = vld [vmem:[%s307 + $0x4] sm:$0xf]
        %v413 = vld [vmem:[%s307 + $0x8] sm:$0xf]
        %v414 = vld [vmem:[%s307 + $0xc] sm:$0xf]
        %v415 = vld [vmem:[%s307 + $0x10] sm:$0xf]
        %v416 = vld [vmem:[%s307 + $0x14] sm:$0xf]
        %v417 = vld [vmem:[%s307 + $0x18] sm:$0xf]
        %v418 = vld [vmem:[%s307 + $0x1c] sm:$0xf]
        %v419 = vld [vmem:[%s307 + $0x20] sm:$0xf]
        %v420 = vld [vmem:[%s307 + $0x24] sm:$0xf]
        %v421 = vld [vmem:[%s307 + $0x28] sm:$0xf]
        %v422 = vld [vmem:[%s307 + $0x2c] sm:$0xf]
        %v423 = vld [vmem:[%s307 + $0x30] sm:$0xf]
        %v424 = vld [vmem:[%s307 + $0x34] sm:$0xf]
        %v425 = vld [vmem:[%s307 + $0x38] sm:$0xf]
        %v426 = vld [vmem:[%s307 + $0x3c] sm:$0xf]
        %v443 = vunpack.c.l.b16 %v411
        %v444 = vunpack.c.l.b16 %v412
        %v445 = vunpack.c.l.b16 %v413
        %v446 = vunpack.c.l.b16 %v414
        %v447 = vunpack.c.l.b16 %v415
        %v448 = vunpack.c.l.b16 %v416
        %v449 = vunpack.c.l.b16 %v417
        %v450 = vunpack.c.l.b16 %v418
        %v451 = vunpack.c.l.b16 %v419
        %v452 = vunpack.c.l.b16 %v420
        %v453 = vunpack.c.l.b16 %v421
        %v454 = vunpack.c.l.b16 %v422
        %v455 = vunpack.c.l.b16 %v423
        %v456 = vunpack.c.l.b16 %v424
        %v457 = vunpack.c.l.b16 %v425
        %v458 = vunpack.c.l.b16 %v426
        %v459 = vpack.c.b16 %v444, %v443
        %v460 = vpack.c.b16 %v446, %v445
        %v461 = vpack.c.b16 %v448, %v447
        %v462 = vpack.c.b16 %v450, %v449
        %v463 = vpack.c.b16 %v452, %v451
        %v464 = vpack.c.b16 %v454, %v453
        %v465 = vpack.c.b16 %v456, %v455
        %v466 = vpack.c.b16 %v458, %v457
        %v491 = vunpack.c.l.b16 %v379
        %v492 = vunpack.c.l.b16 %v380
        %v493 = vunpack.c.l.b16 %v381
        %v494 = vunpack.c.l.b16 %v382
        %v495 = vunpack.c.l.b16 %v383
        %v496 = vunpack.c.l.b16 %v384
        %v497 = vunpack.c.l.b16 %v385
        %v498 = vunpack.c.l.b16 %v386
        %v499 = vunpack.c.l.b16 %v387
        %v500 = vunpack.c.l.b16 %v388
        %v501 = vunpack.c.l.b16 %v389
        %v502 = vunpack.c.l.b16 %v390
        %v503 = vunpack.c.l.b16 %v391
        %v504 = vunpack.c.l.b16 %v392
        %v505 = vunpack.c.l.b16 %v393
        %v506 = vunpack.c.l.b16 %v394
        %v507 = vpack.c.b16 %v492, %v491
        %v508 = vpack.c.b16 %v494, %v493
        %v509 = vpack.c.b16 %v496, %v495
        %v510 = vpack.c.b16 %v498, %v497
        %v511 = vpack.c.b16 %v500, %v499
        %v512 = vpack.c.b16 %v502, %v501
        %v513 = vpack.c.b16 %v504, %v503
        %v514 = vpack.c.b16 %v506, %v505
        %523 = vmatpush.bf16.msra.mxu0 %v514
        %524 = vmatpush.bf16.msra.mxu0 %v513
        %525 = vmatpush.bf16.msra.mxu0 %v512
        %526 = vmatpush.bf16.msra.mxu0 %v511
        %527 = vmatpush.bf16.msra.mxu0 %v510
        %528 = vmatpush.bf16.msra.mxu0 %v509
        %529 = vmatpush.bf16.msra.mxu0 %v508
        %530 = vmatpush.bf16.msra.mxu0 %v507
        %531 = vmatmul.bf16.gmra.mxu0 %v459
        %v532 = vpop.f32.mrf.mxu0
        %v533 = vadd.f32 0.0, %v532
        %v534 = vpop.f32.mrf.mxu0
        %v535 = vadd.f32 0.0, %v534
        %536 = vmatmul.bf16.gmra.mxu0 %v460
        %v537 = vpop.f32.mrf.mxu0
        %v538 = vadd.f32 0.0, %v537
        %v539 = vpop.f32.mrf.mxu0
        %v540 = vadd.f32 0.0, %v539
        %541 = vmatmul.bf16.gmra.mxu0 %v461
        %v542 = vpop.f32.mrf.mxu0
        %v543 = vadd.f32 0.0, %v542
        %v544 = vpop.f32.mrf.mxu0
        %v545 = vadd.f32 0.0, %v544
        %546 = vmatmul.bf16.gmra.mxu0 %v462
        %v547 = vpop.f32.mrf.mxu0
        %v548 = vadd.f32 0.0, %v547
        %v549 = vpop.f32.mrf.mxu0
        %v550 = vadd.f32 0.0, %v549
        %551 = vmatmul.bf16.gmra.mxu0 %v463
        %v552 = vpop.f32.mrf.mxu0
        %v553 = vadd.f32 0.0, %v552
        %v554 = vpop.f32.mrf.mxu0
        %v555 = vadd.f32 0.0, %v554
        %556 = vmatmul.bf16.gmra.mxu0 %v464
        %v557 = vpop.f32.mrf.mxu0
        %v558 = vadd.f32 0.0, %v557
        %v559 = vpop.f32.mrf.mxu0
        %v560 = vadd.f32 0.0, %v559
        %561 = vmatmul.bf16.gmra.mxu0 %v465
        %v562 = vpop.f32.mrf.mxu0
        %v563 = vadd.f32 0.0, %v562
        %v564 = vpop.f32.mrf.mxu0
        %v565 = vadd.f32 0.0, %v564
        %566 = vmatmul.bf16.gmra.mxu0 %v466
        %v567 = vpop.f32.mrf.mxu0
        %v568 = vadd.f32 0.0, %v567
        %v569 = vpop.f32.mrf.mxu0
        %v570 = vadd.f32 0.0, %v569
        %571 = vdwg.mxu0
        %v572 = vadd.f32 %v395, %v533
        %v573 = vadd.f32 %v396, %v535
        %v574 = vadd.f32 %v397, %v538
        %v575 = vadd.f32 %v398, %v540
        %v576 = vadd.f32 %v399, %v543
        %v577 = vadd.f32 %v400, %v545
        %v578 = vadd.f32 %v401, %v548
        %v579 = vadd.f32 %v402, %v550
        %v580 = vadd.f32 %v403, %v553
        %v581 = vadd.f32 %v404, %v555
        %v582 = vadd.f32 %v405, %v558
        %v583 = vadd.f32 %v406, %v560
        %v584 = vadd.f32 %v407, %v563
        %v585 = vadd.f32 %v408, %v565
        %v586 = vadd.f32 %v409, %v568
        %v587 = vadd.f32 %v410, %v570
        %588 = vst [vmem:[%s352] sm:$0xff] %v572
        %589 = vst [vmem:[%s352 + $0x8] sm:$0xff] %v573
        %590 = vst [vmem:[%s352 + $0x10] sm:$0xff] %v574
        %591 = vst [vmem:[%s352 + $0x18] sm:$0xff] %v575
        %592 = vst [vmem:[%s352 + $0x20] sm:$0xff] %v576
        %593 = vst [vmem:[%s352 + $0x28] sm:$0xff] %v577
        %594 = vst [vmem:[%s352 + $0x30] sm:$0xff] %v578
        %595 = vst [vmem:[%s352 + $0x38] sm:$0xff] %v579
        %596 = vst [vmem:[%s352 + $0x40] sm:$0xff] %v580
        %597 = vst [vmem:[%s352 + $0x48] sm:$0xff] %v581
        %598 = vst [vmem:[%s352 + $0x50] sm:$0xff] %v582
        %599 = vst [vmem:[%s352 + $0x58] sm:$0xff] %v583
        %600 = vst [vmem:[%s352 + $0x60] sm:$0xff] %v584
        %601 = vst [vmem:[%s352 + $0x68] sm:$0xff] %v585
        %602 = vst [vmem:[%s352 + $0x70] sm:$0xff] %v586
        %603 = vst [vmem:[%s352 + $0x78] sm:$0xff] %v587
        %p604 = scmp.eq.s32.totalorder %s24, 1
        // Predicated region
        $region78: #{lightgcn_forward.10} parent=68 // pred_check
          %p605 = pneg %p604
        $region79: #{lightgcn_forward.10} parent=68 // pred_check_branch
          %607 = sbr.rel (%p605) target = $region81
        $region80: #{lightgcn_forward.10} parent=68 // pred_region
          %v608 = vld [vmem:[%s352] sm:$0xff]
          %v609 = vld [vmem:[%s352 + $0x8] sm:$0xff]
          %v610 = vld [vmem:[%s352 + $0x10] sm:$0xff]
          %v611 = vld [vmem:[%s352 + $0x18] sm:$0xff]
          %v612 = vld [vmem:[%s352 + $0x20] sm:$0xff]
          %v613 = vld [vmem:[%s352 + $0x28] sm:$0xff]
          %v614 = vld [vmem:[%s352 + $0x30] sm:$0xff]
          %v615 = vld [vmem:[%s352 + $0x38] sm:$0xff]
          %v616 = vld [vmem:[%s352 + $0x40] sm:$0xff]
          %v617 = vld [vmem:[%s352 + $0x48] sm:$0xff]
          %v618 = vld [vmem:[%s352 + $0x50] sm:$0xff]
          %v619 = vld [vmem:[%s352 + $0x58] sm:$0xff]
          %v620 = vld [vmem:[%s352 + $0x60] sm:$0xff]
          %v621 = vld [vmem:[%s352 + $0x68] sm:$0xff]
          %v622 = vld [vmem:[%s352 + $0x70] sm:$0xff]
          %v623 = vld [vmem:[%s352 + $0x78] sm:$0xff]
          %v624 = vpack.c.bf16 %v608, %v608
          %v625 = vpack.c.bf16 %v609, %v609
          %v626 = vpack.c.bf16 %v610, %v610
          %v627 = vpack.c.bf16 %v611, %v611
          %v628 = vpack.c.bf16 %v612, %v612
          %v629 = vpack.c.bf16 %v613, %v613
          %v630 = vpack.c.bf16 %v614, %v614
          %v631 = vpack.c.bf16 %v615, %v615
          %v632 = vpack.c.bf16 %v616, %v616
          %v633 = vpack.c.bf16 %v617, %v617
          %v634 = vpack.c.bf16 %v618, %v618
          %v635 = vpack.c.bf16 %v619, %v619
          %v636 = vpack.c.bf16 %v620, %v620
          %v637 = vpack.c.bf16 %v621, %v621
          %v638 = vpack.c.bf16 %v622, %v622
          %v639 = vpack.c.bf16 %v623, %v623
          %640 = vst [vmem:[%s332] sm:$0xf] %v624
          %641 = vst [vmem:[%s332 + $0x4] sm:$0xf] %v625
          %642 = vst [vmem:[%s332 + $0x8] sm:$0xf] %v626
          %643 = vst [vmem:[%s332 + $0xc] sm:$0xf] %v627
          %644 = vst [vmem:[%s332 + $0x10] sm:$0xf] %v628
          %645 = vst [vmem:[%s332 + $0x14] sm:$0xf] %v629
          %646 = vst [vmem:[%s332 + $0x18] sm:$0xf] %v630
          %647 = vst [vmem:[%s332 + $0x1c] sm:$0xf] %v631
          %648 = vst [vmem:[%s332 + $0x20] sm:$0xf] %v632
          %649 = vst [vmem:[%s332 + $0x24] sm:$0xf] %v633
          %650 = vst [vmem:[%s332 + $0x28] sm:$0xf] %v634
          %651 = vst [vmem:[%s332 + $0x2c] sm:$0xf] %v635
          %652 = vst [vmem:[%s332 + $0x30] sm:$0xf] %v636
          %653 = vst [vmem:[%s332 + $0x34] sm:$0xf] %v637
          %654 = vst [vmem:[%s332 + $0x38] sm:$0xf] %v638
          %655 = vst [vmem:[%s332 + $0x3c] sm:$0xf] %v639
          %v656 = vld [vmem:[%s352] sm:$0xff]
          %v657 = vld [vmem:[%s352 + $0x8] sm:$0xff]
          %v658 = vld [vmem:[%s352 + $0x10] sm:$0xff]
          %v659 = vld [vmem:[%s352 + $0x18] sm:$0xff]
          %v660 = vld [vmem:[%s352 + $0x20] sm:$0xff]
          %v661 = vld [vmem:[%s352 + $0x28] sm:$0xff]
          %v662 = vld [vmem:[%s352 + $0x30] sm:$0xff]
          %v663 = vld [vmem:[%s352 + $0x38] sm:$0xff]
          %v664 = vld [vmem:[%s352 + $0x40] sm:$0xff]
          %v665 = vld [vmem:[%s352 + $0x48] sm:$0xff]
          %v666 = vld [vmem:[%s352 + $0x50] sm:$0xff]
          %v667 = vld [vmem:[%s352 + $0x58] sm:$0xff]
          %v668 = vld [vmem:[%s352 + $0x60] sm:$0xff]
          %v669 = vld [vmem:[%s352 + $0x68] sm:$0xff]
          %v670 = vld [vmem:[%s352 + $0x70] sm:$0xff]
          %v671 = vld [vmem:[%s352 + $0x78] sm:$0xff]
          %v672 = vld [vmem:[%s345] sm:$0xff]
          %v673 = vld [vmem:[%s345 + $0x8] sm:$0xff]
          %v674 = vld [vmem:[%s345 + $0x10] sm:$0xff]
          %v675 = vld [vmem:[%s345 + $0x18] sm:$0xff]
          %v676 = vld [vmem:[%s345 + $0x20] sm:$0xff]
          %v677 = vld [vmem:[%s345 + $0x28] sm:$0xff]
          %v678 = vld [vmem:[%s345 + $0x30] sm:$0xff]
          %v679 = vld [vmem:[%s345 + $0x38] sm:$0xff]
          %v680 = vld [vmem:[%s345 + $0x40] sm:$0xff]
          %v681 = vld [vmem:[%s345 + $0x48] sm:$0xff]
          %v682 = vld [vmem:[%s345 + $0x50] sm:$0xff]
          %v683 = vld [vmem:[%s345 + $0x58] sm:$0xff]
          %v684 = vld [vmem:[%s345 + $0x60] sm:$0xff]
          %v685 = vld [vmem:[%s345 + $0x68] sm:$0xff]
          %v686 = vld [vmem:[%s345 + $0x70] sm:$0xff]
          %v687 = vld [vmem:[%s345 + $0x78] sm:$0xff]
          %v688 = vadd.f32 %v656, %v672
          %v689 = vadd.f32 %v657, %v673
          %v690 = vadd.f32 %v658, %v674
          %v691 = vadd.f32 %v659, %v675
          %v692 = vadd.f32 %v660, %v676
          %v693 = vadd.f32 %v661, %v677
          %v694 = vadd.f32 %v662, %v678
          %v695 = vadd.f32 %v663, %v679
          %v696 = vadd.f32 %v664, %v680
          %v697 = vadd.f32 %v665, %v681
          %v698 = vadd.f32 %v666, %v682
          %v699 = vadd.f32 %v667, %v683
          %v700 = vadd.f32 %v668, %v684
          %v701 = vadd.f32 %v669, %v685
          %v702 = vadd.f32 %v670, %v686
          %v703 = vadd.f32 %v671, %v687
          %704 = vst [vmem:[%s352] sm:$0xff] %v688
          %705 = vst [vmem:[%s352 + $0x8] sm:$0xff] %v689
          %706 = vst [vmem:[%s352 + $0x10] sm:$0xff] %v690
          %707 = vst [vmem:[%s352 + $0x18] sm:$0xff] %v691
          %708 = vst [vmem:[%s352 + $0x20] sm:$0xff] %v692
          %709 = vst [vmem:[%s352 + $0x28] sm:$0xff] %v693
          %710 = vst [vmem:[%s352 + $0x30] sm:$0xff] %v694
          %711 = vst [vmem:[%s352 + $0x38] sm:$0xff] %v695
          %712 = vst [vmem:[%s352 + $0x40] sm:$0xff] %v696
          %713 = vst [vmem:[%s352 + $0x48] sm:$0xff] %v697
          %714 = vst [vmem:[%s352 + $0x50] sm:$0xff] %v698
          %715 = vst [vmem:[%s352 + $0x58] sm:$0xff] %v699
          %716 = vst [vmem:[%s352 + $0x60] sm:$0xff] %v700
          %717 = vst [vmem:[%s352 + $0x68] sm:$0xff] %v701
          %718 = vst [vmem:[%s352 + $0x70] sm:$0xff] %v702
          %719 = vst [vmem:[%s352 + $0x78] sm:$0xff] %v703
        $region81: #{lightgcn_forward.10} parent=68 // pred_fallthru
          _
        %s720 = sand.u32 %s114, 1
        %s721 = scalar_lea.sflag [#allocation4], %s720
        %s722 = sand.u32 %s114, 1
        %s723 = smul.addr %s722, 64
        %s724 = scalar_lea.vmem [#allocation3], %s723
        %s725 = smul.u32 16, %s23
        %p726 = scmp.lt.s32.totalorder %s725, 31
        %s727 = scalar_select %p726, %s725, 31
        %s728 = smul.addr %s727, 8
        %s729 = scalar_lea.vmem %s4, %s728
        // Predicated region
        $region82: #{lightgcn_forward.10} parent=68 // pred_check
          %p730 = pneg %p124
        $region83: #{lightgcn_forward.10} parent=68 // pred_check_branch
          %732 = sbr.rel (%p730) target = $region85
        $region84: #{lightgcn_forward.10} parent=68 // pred_region
          %s733 = smul.u32 16, %s23
          %735 = vsyncadd %s721, 0
          %s736 = smul.addr %s733, 4
          %s737 = scalar_lea.hbm %s3, %s736
          %s738 = sshll.u32 %s724, 4
          %s739 = int_to_ptr.vmem [resolvable:$true] %s738
          %s740 = sshll.u32 %s737, 4
          %s741 = int_to_ptr.hbm [resolvable:$true] %s740
          %746 = dma.vmem_to_hbm [thread:$0]  %s739, 1024, %s741, %s721, 64, 64, 4
        $region85: #{lightgcn_forward.10} parent=68 // pred_fallthru
          _
        // Predicated region
        $region86: #{lightgcn_forward.10} parent=68 // pred_check
          %p747 = pneg %p150
        $region87: #{lightgcn_forward.10} parent=68 // pred_check_branch
          %749 = sbr.rel (%p747) target = $region89
        $region88: #{lightgcn_forward.10} parent=68 // pred_region
          %s750 = smul.u32 16, %s23
        $region89: #{lightgcn_forward.10} parent=68 // pred_fallthru
          _
      $region69: #{lightgcn_forward.10} parent=5 // pred_fallthru
        _
      %p751 = scmp.le.s32.totalorder 2, %s14
      // Predicated region
      $region90: #{lightgcn_forward.10} parent=5 // pred_check
        %p752 = pneg %p751
      $region91: #{lightgcn_forward.10} parent=5 // pred_check_branch
        %754 = sbr.rel (%p752) target = $region93
      $region92: #{lightgcn_forward.10} parent=5 // pred_region
        %s755 = ssub.s32 %s14, 2
        // Predicated region
        $region94: #{lightgcn_forward.10} parent=92 // pred_check
          %p756 = pneg %p130
        $region95: #{lightgcn_forward.10} parent=92 // pred_check_branch
          %758 = sbr.rel (%p756) target = $region97
        $region96: #{lightgcn_forward.10} parent=92 // pred_region
          %s759 = sand.u32 %s115, 1
          %s760 = scalar_lea.sflag [#allocation4], %s759
          %s761 = sand.u32 %s115, 1
          %s762 = smul.addr %s761, 64
          %s763 = scalar_lea.vmem [#allocation3], %s762
          %765 = dma.done %s760, 1024
        $region97: #{lightgcn_forward.10} parent=92 // pred_fallthru
          _
        // Predicated region
        $region98: #{lightgcn_forward.10} parent=92 // pred_check
          %p766 = pneg %p156
        $region99: #{lightgcn_forward.10} parent=92 // pred_check_branch
          %768 = sbr.rel (%p766) target = $region101
        $region100: #{lightgcn_forward.10} parent=92 // pred_region
          %s769 = smul.u32 16, %s25
          %p770 = scmp.lt.s32.totalorder %s769, 31
          %s771 = scalar_select %p770, %s769, 31
          %s772 = smul.addr %s771, 8
          %s773 = scalar_lea.vmem %s4, %s772
        $region101: #{lightgcn_forward.10} parent=92 // pred_fallthru
          _
      $region93: #{lightgcn_forward.10} parent=5 // pred_fallthru
        _
    $region6: #{lightgcn_forward.10} parent=1 // loop_footer
      %s18 = sadd.s32 1, %s14
    $region7: #{lightgcn_forward.10} parent=1 // loop_footer_branch
      %13 = sbr.rel target = $region3
    $region8: #{lightgcn_forward.10} parent=1 // loop_exit
      _
    %774 = vsyncpa [#allocation4], 1
    %s775 = scalar_lea.sflag [#allocation4], 1
    %776 = vsyncpa %s775, 1

</llo_original>
